<compile_context>
chip_gen: v6e
topology: v6e:2x2x1
jax: 0.10.0
libtpu: 0.0.40
codegen_flags: <defaults>
</compile_context>

<pallas_src>
import jax
import jax.numpy as jnp
from jax.experimental import pallas as pl
from jax.experimental.pallas import tpu as pltpu


LANES = 128
SUBLANES = 8
_TARGET_BLOCK_BYTES = 4 * 1024 * 1024      # ~4 MiB per block (1M f32 elems)
_MIN_PALLAS_ELEMS = 256 * 1024             # below this, fused jnp is faster
_VMEM_LIMIT_BYTES = 32 * 1024 * 1024       # 2x(in)+2x(out) 4 MiB blocks = 16 MiB live


def _h_sigmoid_kernel(x_ref, o_ref):
    x = x_ref[...]
    # relu6(x + 3) in the input dtype (VPU elementwise) ...
    y = jnp.clip(x + 3.0, 0.0, 6.0)
    # ... then scale by 1/6 in f32 before casting back (bf16-safe).
    o_ref[...] = (y.astype(jnp.float32) * (1.0 / 6.0)).astype(o_ref.dtype)


def _h_sigmoid_ref(x: jax.Array) -> jax.Array:
    """Plain fused-jnp path (small / awkward sizes)."""
    return (jnp.clip(x + 3.0, 0.0, 6.0) / 6.0).astype(x.dtype)


def _round_up(a: int, b: int) -> int:
    return -(-a // b) * b


def h_sigmoid(x: jax.Array) -> jax.Array:
    """Elementwise hard-sigmoid: relu6(x + 3) / 6, matching PyTorch semantics.

    Callers may donate x; the Pallas path aliases the input buffer to the output.
    """
    orig_shape = x.shape
    dtype = x.dtype
    n = x.size
    if n == 0:
        return x

    # Small activations (the MobileNetV3 common case) or non-128-divisible
    # sizes: a standalone Pallas launch is pure overhead / would need a
    # pad+slice round trip. Plain jnp fuses for free and is strictly faster.
    if n < _MIN_PALLAS_ELEMS or n % LANES != 0:
        return _h_sigmoid_ref(x)

    # Widest lane-dense column count that divides n exactly -> one contiguous
    # HBM DMA per grid step, unmasked lane-dense stores.
    cols = LANES
    for cand in (4096, 2048, 1024, 512, 256):
        if n % cand == 0:
            cols = cand
            break
    rows = n // cols
    slab = x.reshape(rows, cols)

    # Row tile: ~_TARGET_BLOCK_BYTES per block, multiple of 8 sublanes.
    itemsize = jnp.dtype(dtype).itemsize
    target_elems = max(_TARGET_BLOCK_BYTES // itemsize, SUBLANES * cols)
    tm = max(target_elems // cols, SUBLANES)
    tm = (tm // SUBLANES) * SUBLANES
    tm = min(tm, _round_up(rows, SUBLANES))

    grid = (pl.cdiv(rows, tm),)  # partial last block is masked by Pallas

    out = pl.pallas_call(
        _h_sigmoid_kernel,
        out_shape=jax.ShapeDtypeStruct(slab.shape, dtype),
        grid_spec=pltpu.PrefetchScalarGridSpec(
            num_scalar_prefetch=0,
            grid=grid,
            in_specs=[pl.BlockSpec((tm, cols), lambda i: (i, 0))],
            out_specs=pl.BlockSpec((tm, cols), lambda i: (i, 0)),
        ),
        compiler_params=pltpu.CompilerParams(
            dimension_semantics=("parallel",),
            vmem_limit_bytes=_VMEM_LIMIT_BYTES,
        ),
        input_output_aliases={0: 0},
    )(slab)

    return out.reshape(orig_shape)


if __name__ == "__main__":
    key = jax.random.PRNGKey(0)
    k1, k2, k3 = jax.random.split(key, 3)

    # 1) Small MobileNetV3-style activation (takes the fused-jnp fast path).
    x_small = jax.random.normal(k1, (2, 4, 16, 16), dtype=jnp.float32) * 4.0
    y_small = jax.block_until_ready(h_sigmoid(x_small))
    assert y_small.shape == x_small.shape
    assert y_small.dtype == x_small.dtype
    assert jnp.allclose(y_small, jnp.clip(x_small + 3.0, 0.0, 6.0) / 6.0, atol=1e-6)

    # 2) Larger activation that exercises the Pallas kernel path
    #    (2*64*56*56 = 401408 elements > _MIN_PALLAS_ELEMS, 128-divisible).
    x_big = jax.random.normal(k2, (2, 64, 56, 56), dtype=jnp.float32) * 4.0
    y_big = jax.block_until_ready(h_sigmoid(x_big))
    assert y_big.shape == x_big.shape
    assert y_big.dtype == x_big.dtype
    assert jnp.allclose(y_big, jnp.clip(x_big + 3.0, 0.0, 6.0) / 6.0, atol=1e-6)

    # 3) Awkward (non-128-divisible) size: fused-jnp fallback, no pad/slice.
    x_odd = jax.random.normal(k3, (3, 5, 7, 11), dtype=jnp.float32) * 4.0
    y_odd = jax.block_until_ready(h_sigmoid(x_odd))
    assert jnp.allclose(y_odd, jnp.clip(x_odd + 3.0, 0.0, 6.0) / 6.0, atol=1e-6)

    print("KERNEL_OK")
</pallas_src>

<mosaic_0001>
module attributes {stable_mosaic.version = 11 : i64} {
  func.func @_h_sigmoid_kernel(%arg0: i32, %arg1: memref<104x4096xf32, #tpu.memory_space<vmem>>, %arg2: memref<104x4096xf32, #tpu.memory_space<vmem>>) attributes {dimension_semantics = [#tpu.dimension_semantics<parallel>], iteration_bounds = array<i64: 1>, scalar_prefetch = 0 : i64, scratch_operands = 0 : i64, tpu.core_type = #tpu.core_type<tc>, window_params = [{transform_indices = @transform_0, window_bounds = array<i64: 104, 4096>}, {transform_indices = @transform_1, window_bounds = array<i64: 104, 4096>}]} {
    %c0 = arith.constant 0 : index
    %c0_0 = arith.constant 0 : index
    %0 = vector.load %arg1[%c0, %c0_0] : memref<104x4096xf32, #tpu.memory_space<vmem>>, vector<104x4096xf32>
    %cst = arith.constant 3.000000e+00 : f32
    %1 = vector.broadcast %cst : f32 to vector<104x4096xf32>
    %2 = arith.addf %0, %1 : vector<104x4096xf32>
    %cst_1 = arith.constant 0.000000e+00 : f32
    %cst_2 = arith.constant 6.000000e+00 : f32
    %3 = vector.broadcast %cst_1 : f32 to vector<104x4096xf32>
    %4 = arith.maximumf %3, %2 : vector<104x4096xf32>
    %5 = vector.broadcast %cst_2 : f32 to vector<104x4096xf32>
    %6 = arith.minimumf %5, %4 : vector<104x4096xf32>
    %cst_3 = arith.constant 0.166666672 : f32
    %7 = vector.broadcast %cst_3 : f32 to vector<104x4096xf32>
    %8 = arith.mulf %6, %7 : vector<104x4096xf32>
    %c0_4 = arith.constant 0 : index
    %c0_5 = arith.constant 0 : index
    %9 = vector.load %arg2[%c0_4, %c0_5] : memref<104x4096xf32, #tpu.memory_space<vmem>>, vector<104x4096xf32>
    tpu.vector_store %arg2[%c0_4, %c0_5], %8 {strides = array<i32>} : memref<104x4096xf32, #tpu.memory_space<vmem>>, vector<104x4096xf32>,
    return
  }
  func.func @transform_0(%arg0: i32) -> (i32, i32) {
    %c0_i32 = arith.constant 0 : i32
    %c0_i32_0 = arith.constant 0 : i32
    return %arg0, %c0_i32 : i32, i32
  }
  func.func @transform_1(%arg0: i32) -> (i32, i32) {
    %c0_i32 = arith.constant 0 : i32
    %c0_i32_0 = arith.constant 0 : i32
    return %arg0, %c0_i32 : i32, i32
  }
}

</mosaic_0001>

<llo_original>
// kernel: tpu_custom_call.1
$region0: #{tpu_custom_call.1}
  #allocation0 [shape = 'u32[]', space=smem, size = 0x4, offset = 0x4, fixed_abs, tag = 'smem constant byte address 0x4 - core index']
  #allocation1 [shape = 'u32[144,128]{1,0:T(1,128)}', space=vmem, size = 0x12000, scoped, tag = 'internal scratch']
  %s0 = inlined_call_operand.hbm [shape: f32[98,4096], index: 0, kind: input, shape index: {}, may-alias: {0,1}]
  %s1 = inlined_call_operand.hbm [shape: f32[98,4096], index: 1, kind: output, shape index: {}, may-alias: {0,1}]
  %s2 = sld [smem:[#allocation0]]
  $region18: #{tpu_custom_call.1} parent=0
    _
  %s4 = ssub.s32 1, %s2
  %s5 = scalar_select 0, %s4, %s2
  $region1: #{tpu_custom_call.1} parent=0
    #allocation2 [shape = 'u8[1703936]{0}', space=vmem, size = 0x1a0000, scoped, tag = 'input window, operand 0, single buffered']
    #allocation3 [shape = 's32[1]{0}', space=sflag, size = 0x4, scoped, tag = 'scoped memory for tpu_custom_call.1']
    #allocation4 [shape = 's32[1]{0}', space=sflag, size = 0x4, scoped, tag = 'scoped memory for tpu_custom_call.1']
    #allocation5 [shape = 'u8[1703936]{0}', space=vmem, size = 0x1a0000, scoped, tag = 'output window, operand 0, single buffered']
    %6 = vsyncpa [#allocation3], 0
    %7 = vsyncpa [#allocation4], 0
    // Predicated region
    $region2: #{tpu_custom_call.1} parent=1 // pred_check
      _
    $region3: #{tpu_custom_call.1} parent=1 // pred_check_branch
      %9 = sbr.rel (0) target = $region5
    $region4: #{tpu_custom_call.1} parent=1 // pred_region
      %s11 = ssub.s32 53248, 53248
      %12 = vsyncadd [#allocation3], %s11
      %s13 = sshll.u32 [#allocation2], 4
      %s14 = int_to_ptr.vmem [resolvable:$true] %s13
      %19 = dma.hbm_to_vmem [thread:$0]  %s0, 53248, %s14, [#allocation3], 4096, 4096, 256
    $region5: #{tpu_custom_call.1} parent=1 // pred_fallthru
      _
    // Predicated region
    $region6: #{tpu_custom_call.1} parent=1 // pred_check
      _
    $region7: #{tpu_custom_call.1} parent=1 // pred_check_branch
      %21 = sbr.rel (0) target = $region9
    $region8: #{tpu_custom_call.1} parent=1 // pred_region
      %22 = dma.done [#allocation3], 53248
    $region9: #{tpu_custom_call.1} parent=1 // pred_fallthru
      _
    %v23 = vld [vmem:[#allocation2] sm:$0xff]
    %v24 = vld [vmem:[#allocation2 + $0x8] sm:$0xff]
    %v25 = vld [vmem:[#allocation2 + $0x10] sm:$0xff]
    %v26 = vld [vmem:[#allocation2 + $0x18] sm:$0xff]
    %v27 = vld [vmem:[#allocation2 + $0x20] sm:$0xff]
    %v28 = vld [vmem:[#allocation2 + $0x28] sm:$0xff]
    %v29 = vld [vmem:[#allocation2 + $0x30] sm:$0xff]
    %v30 = vld [vmem:[#allocation2 + $0x38] sm:$0xff]
    %v31 = vld [vmem:[#allocation2 + $0x40] sm:$0xff]
    %v32 = vld [vmem:[#allocation2 + $0x48] sm:$0xff]
    %v33 = vld [vmem:[#allocation2 + $0x50] sm:$0xff]
    %v34 = vld [vmem:[#allocation2 + $0x58] sm:$0xff]
    %v35 = vld [vmem:[#allocation2 + $0x60] sm:$0xff]
    %v36 = vld [vmem:[#allocation2 + $0x68] sm:$0xff]
    %v37 = vld [vmem:[#allocation2 + $0x70] sm:$0xff]
    %v38 = vld [vmem:[#allocation2 + $0x78] sm:$0xff]
    %v39 = vld [vmem:[#allocation2 + $0x80] sm:$0xff]
    %v40 = vld [vmem:[#allocation2 + $0x88] sm:$0xff]
    %v41 = vld [vmem:[#allocation2 + $0x90] sm:$0xff]
    %v42 = vld [vmem:[#allocation2 + $0x98] sm:$0xff]
    %v43 = vld [vmem:[#allocation2 + $0xa0] sm:$0xff]
    %v44 = vld [vmem:[#allocation2 + $0xa8] sm:$0xff]
    %v45 = vld [vmem:[#allocation2 + $0xb0] sm:$0xff]
    %v46 = vld [vmem:[#allocation2 + $0xb8] sm:$0xff]
    %v47 = vld [vmem:[#allocation2 + $0xc0] sm:$0xff]
    %v48 = vld [vmem:[#allocation2 + $0xc8] sm:$0xff]
    %v49 = vld [vmem:[#allocation2 + $0xd0] sm:$0xff]
    %v50 = vld [vmem:[#allocation2 + $0xd8] sm:$0xff]
    %v51 = vld [vmem:[#allocation2 + $0xe0] sm:$0xff]
    %v52 = vld [vmem:[#allocation2 + $0xe8] sm:$0xff]
    %v53 = vld [vmem:[#allocation2 + $0xf0] sm:$0xff]
    %v54 = vld [vmem:[#allocation2 + $0xf8] sm:$0xff]
    %v55 = vld [vmem:[#allocation2 + $0x100] sm:$0xff]
    %v56 = vld [vmem:[#allocation2 + $0x108] sm:$0xff]
    %v57 = vld [vmem:[#allocation2 + $0x110] sm:$0xff]
    %v58 = vld [vmem:[#allocation2 + $0x118] sm:$0xff]
    %v59 = vld [vmem:[#allocation2 + $0x120] sm:$0xff]
    %v60 = vld [vmem:[#allocation2 + $0x128] sm:$0xff]
    %v61 = vld [vmem:[#allocation2 + $0x130] sm:$0xff]
    %v62 = vld [vmem:[#allocation2 + $0x138] sm:$0xff]
    %v63 = vld [vmem:[#allocation2 + $0x140] sm:$0xff]
    %v64 = vld [vmem:[#allocation2 + $0x148] sm:$0xff]
    %v65 = vld [vmem:[#allocation2 + $0x150] sm:$0xff]
    %v66 = vld [vmem:[#allocation2 + $0x158] sm:$0xff]
    %v67 = vld [vmem:[#allocation2 + $0x160] sm:$0xff]
    %v68 = vld [vmem:[#allocation2 + $0x168] sm:$0xff]
    %v69 = vld [vmem:[#allocation2 + $0x170] sm:$0xff]
    %v70 = vld [vmem:[#allocation2 + $0x178] sm:$0xff]
    %v71 = vld [vmem:[#allocation2 + $0x180] sm:$0xff]
    %v72 = vld [vmem:[#allocation2 + $0x188] sm:$0xff]
    %v73 = vld [vmem:[#allocation2 + $0x190] sm:$0xff]
    %v74 = vld [vmem:[#allocation2 + $0x198] sm:$0xff]
    %v75 = vld [vmem:[#allocation2 + $0x1a0] sm:$0xff]
    %v76 = vld [vmem:[#allocation2 + $0x1a8] sm:$0xff]
    %v77 = vld [vmem:[#allocation2 + $0x1b0] sm:$0xff]
    %v78 = vld [vmem:[#allocation2 + $0x1b8] sm:$0xff]
    %v79 = vld [vmem:[#allocation2 + $0x1c0] sm:$0xff]
    %v80 = vld [vmem:[#allocation2 + $0x1c8] sm:$0xff]
    %v81 = vld [vmem:[#allocation2 + $0x1d0] sm:$0xff]
    %v82 = vld [vmem:[#allocation2 + $0x1d8] sm:$0xff]
    %v83 = vld [vmem:[#allocation2 + $0x1e0] sm:$0xff]
    %v84 = vld [vmem:[#allocation2 + $0x1e8] sm:$0xff]
    %v85 = vld [vmem:[#allocation2 + $0x1f0] sm:$0xff]
    %v86 = vld [vmem:[#allocation2 + $0x1f8] sm:$0xff]
    %v87 = vld [vmem:[#allocation2 + $0x200] sm:$0xff]
    %v88 = vld [vmem:[#allocation2 + $0x208] sm:$0xff]
    %v89 = vld [vmem:[#allocation2 + $0x210] sm:$0xff]
    %v90 = vld [vmem:[#allocation2 + $0x218] sm:$0xff]
    %v91 = vld [vmem:[#allocation2 + $0x220] sm:$0xff]
    %v92 = vld [vmem:[#allocation2 + $0x228] sm:$0xff]
    %v93 = vld [vmem:[#allocation2 + $0x230] sm:$0xff]
    %v94 = vld [vmem:[#allocation2 + $0x238] sm:$0xff]
    %v95 = vld [vmem:[#allocation2 + $0x240] sm:$0xff]
    %v96 = vld [vmem:[#allocation2 + $0x248] sm:$0xff]
    %v97 = vld [vmem:[#allocation2 + $0x250] sm:$0xff]
    %v98 = vld [vmem:[#allocation2 + $0x258] sm:$0xff]
    %v99 = vld [vmem:[#allocation2 + $0x260] sm:$0xff]
    %v100 = vld [vmem:[#allocation2 + $0x268] sm:$0xff]
    %v101 = vld [vmem:[#allocation2 + $0x270] sm:$0xff]
    %v102 = vld [vmem:[#allocation2 + $0x278] sm:$0xff]
    %v103 = vld [vmem:[#allocation2 + $0x280] sm:$0xff]
    %v104 = vld [vmem:[#allocation2 + $0x288] sm:$0xff]
    %v105 = vld [vmem:[#allocation2 + $0x290] sm:$0xff]
    %v106 = vld [vmem:[#allocation2 + $0x298] sm:$0xff]
    %v107 = vld [vmem:[#allocation2 + $0x2a0] sm:$0xff]
    %v108 = vld [vmem:[#allocation2 + $0x2a8] sm:$0xff]
    %v109 = vld [vmem:[#allocation2 + $0x2b0] sm:$0xff]
    %v110 = vld [vmem:[#allocation2 + $0x2b8] sm:$0xff]
    %v111 = vld [vmem:[#allocation2 + $0x2c0] sm:$0xff]
    %v112 = vld [vmem:[#allocation2 + $0x2c8] sm:$0xff]
    %v113 = vld [vmem:[#allocation2 + $0x2d0] sm:$0xff]
    %v114 = vld [vmem:[#allocation2 + $0x2d8] sm:$0xff]
    %v115 = vld [vmem:[#allocation2 + $0x2e0] sm:$0xff]
    %v116 = vld [vmem:[#allocation2 + $0x2e8] sm:$0xff]
    %v117 = vld [vmem:[#allocation2 + $0x2f0] sm:$0xff]
    %v118 = vld [vmem:[#allocation2 + $0x2f8] sm:$0xff]
    %v119 = vld [vmem:[#allocation2 + $0x300] sm:$0xff]
    %v120 = vld [vmem:[#allocation2 + $0x308] sm:$0xff]
    %v121 = vld [vmem:[#allocation2 + $0x310] sm:$0xff]
    %v122 = vld [vmem:[#allocation2 + $0x318] sm:$0xff]
    %v123 = vld [vmem:[#allocation2 + $0x320] sm:$0xff]
    %v124 = vld [vmem:[#allocation2 + $0x328] sm:$0xff]
    %v125 = vld [vmem:[#allocation2 + $0x330] sm:$0xff]
    %v126 = vld [vmem:[#allocation2 + $0x338] sm:$0xff]
    %v127 = vld [vmem:[#allocation2 + $0x340] sm:$0xff]
    %v128 = vld [vmem:[#allocation2 + $0x348] sm:$0xff]
    %v129 = vld [vmem:[#allocation2 + $0x350] sm:$0xff]
    %v130 = vld [vmem:[#allocation2 + $0x358] sm:$0xff]
    %v131 = vld [vmem:[#allocation2 + $0x360] sm:$0xff]
    %v132 = vld [vmem:[#allocation2 + $0x368] sm:$0xff]
    %v133 = vld [vmem:[#allocation2 + $0x370] sm:$0xff]
    %v134 = vld [vmem:[#allocation2 + $0x378] sm:$0xff]
    %v135 = vld [vmem:[#allocation2 + $0x380] sm:$0xff]
    %v136 = vld [vmem:[#allocation2 + $0x388] sm:$0xff]
    %v137 = vld [vmem:[#allocation2 + $0x390] sm:$0xff]
    %v138 = vld [vmem:[#allocation2 + $0x398] sm:$0xff]
    %v139 = vld [vmem:[#allocation2 + $0x3a0] sm:$0xff]
    %v140 = vld [vmem:[#allocation2 + $0x3a8] sm:$0xff]
    %v141 = vld [vmem:[#allocation2 + $0x3b0] sm:$0xff]
    %v142 = vld [vmem:[#allocation2 + $0x3b8] sm:$0xff]
    %v143 = vld [vmem:[#allocation2 + $0x3c0] sm:$0xff]
    %v144 = vld [vmem:[#allocation2 + $0x3c8] sm:$0xff]
    %v145 = vld [vmem:[#allocation2 + $0x3d0] sm:$0xff]
    %v146 = vld [vmem:[#allocation2 + $0x3d8] sm:$0xff]
    %v147 = vld [vmem:[#allocation2 + $0x3e0] sm:$0xff]
    %v148 = vld [vmem:[#allocation2 + $0x3e8] sm:$0xff]
    %v149 = vld [vmem:[#allocation2 + $0x3f0] sm:$0xff]
    %v150 = vld [vmem:[#allocation2 + $0x3f8] sm:$0xff]
    %v151 = vld [vmem:[#allocation2 + $0x400] sm:$0xff]
    %v152 = vld [vmem:[#allocation2 + $0x408] sm:$0xff]
    %v153 = vld [vmem:[#allocation2 + $0x410] sm:$0xff]
    %v154 = vld [vmem:[#allocation2 + $0x418] sm:$0xff]
    %v155 = vld [vmem:[#allocation2 + $0x420] sm:$0xff]
    %v156 = vld [vmem:[#allocation2 + $0x428] sm:$0xff]
    %v157 = vld [vmem:[#allocation2 + $0x430] sm:$0xff]
    %v158 = vld [vmem:[#allocation2 + $0x438] sm:$0xff]
    %v159 = vld [vmem:[#allocation2 + $0x440] sm:$0xff]
    %v160 = vld [vmem:[#allocation2 + $0x448] sm:$0xff]
    %v161 = vld [vmem:[#allocation2 + $0x450] sm:$0xff]
    %v162 = vld [vmem:[#allocation2 + $0x458] sm:$0xff]
    %v163 = vld [vmem:[#allocation2 + $0x460] sm:$0xff]
    %v164 = vld [vmem:[#allocation2 + $0x468] sm:$0xff]
    %v165 = vld [vmem:[#allocation2 + $0x470] sm:$0xff]
    %v166 = vld [vmem:[#allocation2 + $0x478] sm:$0xff]
    %v167 = vld [vmem:[#allocation2 + $0x480] sm:$0xff]
    %v168 = vld [vmem:[#allocation2 + $0x488] sm:$0xff]
    %v169 = vld [vmem:[#allocation2 + $0x490] sm:$0xff]
    %v170 = vld [vmem:[#allocation2 + $0x498] sm:$0xff]
    %v171 = vld [vmem:[#allocation2 + $0x4a0] sm:$0xff]
    %v172 = vld [vmem:[#allocation2 + $0x4a8] sm:$0xff]
    %v173 = vld [vmem:[#allocation2 + $0x4b0] sm:$0xff]
    %v174 = vld [vmem:[#allocation2 + $0x4b8] sm:$0xff]
    %v175 = vld [vmem:[#allocation2 + $0x4c0] sm:$0xff]
    %v176 = vld [vmem:[#allocation2 + $0x4c8] sm:$0xff]
    %v177 = vld [vmem:[#allocation2 + $0x4d0] sm:$0xff]
    %v178 = vld [vmem:[#allocation2 + $0x4d8] sm:$0xff]
    %v179 = vld [vmem:[#allocation2 + $0x4e0] sm:$0xff]
    %v180 = vld [vmem:[#allocation2 + $0x4e8] sm:$0xff]
    %v181 = vld [vmem:[#allocation2 + $0x4f0] sm:$0xff]
    %v182 = vld [vmem:[#allocation2 + $0x4f8] sm:$0xff]
    %v183 = vld [vmem:[#allocation2 + $0x500] sm:$0xff]
    %v184 = vld [vmem:[#allocation2 + $0x508] sm:$0xff]
    %v185 = vld [vmem:[#allocation2 + $0x510] sm:$0xff]
    %v186 = vld [vmem:[#allocation2 + $0x518] sm:$0xff]
    %v187 = vld [vmem:[#allocation2 + $0x520] sm:$0xff]
    %v188 = vld [vmem:[#allocation2 + $0x528] sm:$0xff]
    %v189 = vld [vmem:[#allocation2 + $0x530] sm:$0xff]
    %v190 = vld [vmem:[#allocation2 + $0x538] sm:$0xff]
    %v191 = vld [vmem:[#allocation2 + $0x540] sm:$0xff]
    %v192 = vld [vmem:[#allocation2 + $0x548] sm:$0xff]
    %v193 = vld [vmem:[#allocation2 + $0x550] sm:$0xff]
    %v194 = vld [vmem:[#allocation2 + $0x558] sm:$0xff]
    %v195 = vld [vmem:[#allocation2 + $0x560] sm:$0xff]
    %v196 = vld [vmem:[#allocation2 + $0x568] sm:$0xff]
    %v197 = vld [vmem:[#allocation2 + $0x570] sm:$0xff]
    %v198 = vld [vmem:[#allocation2 + $0x578] sm:$0xff]
    %v199 = vld [vmem:[#allocation2 + $0x580] sm:$0xff]
    %v200 = vld [vmem:[#allocation2 + $0x588] sm:$0xff]
    %v201 = vld [vmem:[#allocation2 + $0x590] sm:$0xff]
    %v202 = vld [vmem:[#allocation2 + $0x598] sm:$0xff]
    %v203 = vld [vmem:[#allocation2 + $0x5a0] sm:$0xff]
    %v204 = vld [vmem:[#allocation2 + $0x5a8] sm:$0xff]
    %v205 = vld [vmem:[#allocation2 + $0x5b0] sm:$0xff]
    %v206 = vld [vmem:[#allocation2 + $0x5b8] sm:$0xff]
    %v207 = vld [vmem:[#allocation2 + $0x5c0] sm:$0xff]
    %v208 = vld [vmem:[#allocation2 + $0x5c8] sm:$0xff]
    %v209 = vld [vmem:[#allocation2 + $0x5d0] sm:$0xff]
    %v210 = vld [vmem:[#allocation2 + $0x5d8] sm:$0xff]
    %v211 = vld [vmem:[#allocation2 + $0x5e0] sm:$0xff]
    %v212 = vld [vmem:[#allocation2 + $0x5e8] sm:$0xff]
    %v213 = vld [vmem:[#allocation2 + $0x5f0] sm:$0xff]
    %v214 = vld [vmem:[#allocation2 + $0x5f8] sm:$0xff]
    %v215 = vld [vmem:[#allocation2 + $0x600] sm:$0xff]
    %v216 = vld [vmem:[#allocation2 + $0x608] sm:$0xff]
    %v217 = vld [vmem:[#allocation2 + $0x610] sm:$0xff]
    %v218 = vld [vmem:[#allocation2 + $0x618] sm:$0xff]
    %v219 = vld [vmem:[#allocation2 + $0x620] sm:$0xff]
    %v220 = vld [vmem:[#allocation2 + $0x628] sm:$0xff]
    %v221 = vld [vmem:[#allocation2 + $0x630] sm:$0xff]
    %v222 = vld [vmem:[#allocation2 + $0x638] sm:$0xff]
    %v223 = vld [vmem:[#allocation2 + $0x640] sm:$0xff]
    %v224 = vld [vmem:[#allocation2 + $0x648] sm:$0xff]
    %v225 = vld [vmem:[#allocation2 + $0x650] sm:$0xff]
    %v226 = vld [vmem:[#allocation2 + $0x658] sm:$0xff]
    %v227 = vld [vmem:[#allocation2 + $0x660] sm:$0xff]
    %v228 = vld [vmem:[#allocation2 + $0x668] sm:$0xff]
    %v229 = vld [vmem:[#allocation2 + $0x670] sm:$0xff]
    %v230 = vld [vmem:[#allocation2 + $0x678] sm:$0xff]
    %v231 = vld [vmem:[#allocation2 + $0x680] sm:$0xff]
    %v232 = vld [vmem:[#allocation2 + $0x688] sm:$0xff]
    %v233 = vld [vmem:[#allocation2 + $0x690] sm:$0xff]
    %v234 = vld [vmem:[#allocation2 + $0x698] sm:$0xff]
    %v235 = vld [vmem:[#allocation2 + $0x6a0] sm:$0xff]
    %v236 = vld [vmem:[#allocation2 + $0x6a8] sm:$0xff]
    %v237 = vld [vmem:[#allocation2 + $0x6b0] sm:$0xff]
    %v238 = vld [vmem:[#allocation2 + $0x6b8] sm:$0xff]
    %v239 = vld [vmem:[#allocation2 + $0x6c0] sm:$0xff]
    %v240 = vld [vmem:[#allocation2 + $0x6c8] sm:$0xff]
    %v241 = vld [vmem:[#allocation2 + $0x6d0] sm:$0xff]
    %v242 = vld [vmem:[#allocation2 + $0x6d8] sm:$0xff]
    %v243 = vld [vmem:[#allocation2 + $0x6e0] sm:$0xff]
    %v244 = vld [vmem:[#allocation2 + $0x6e8] sm:$0xff]
    %v245 = vld [vmem:[#allocation2 + $0x6f0] sm:$0xff]
    %v246 = vld [vmem:[#allocation2 + $0x6f8] sm:$0xff]
    %v247 = vld [vmem:[#allocation2 + $0x700] sm:$0xff]
    %v248 = vld [vmem:[#allocation2 + $0x708] sm:$0xff]
    %v249 = vld [vmem:[#allocation2 + $0x710] sm:$0xff]
    %v250 = vld [vmem:[#allocation2 + $0x718] sm:$0xff]
    %v251 = vld [vmem:[#allocation2 + $0x720] sm:$0xff]
    %v252 = vld [vmem:[#allocation2 + $0x728] sm:$0xff]
    %v253 = vld [vmem:[#allocation2 + $0x730] sm:$0xff]
    %v254 = vld [vmem:[#allocation2 + $0x738] sm:$0xff]
    %v255 = vld [vmem:[#allocation2 + $0x740] sm:$0xff]
    %v256 = vld [vmem:[#allocation2 + $0x748] sm:$0xff]
    %v257 = vld [vmem:[#allocation2 + $0x750] sm:$0xff]
    %v258 = vld [vmem:[#allocation2 + $0x758] sm:$0xff]
    %v259 = vld [vmem:[#allocation2 + $0x760] sm:$0xff]
    %v260 = vld [vmem:[#allocation2 + $0x768] sm:$0xff]
    %v261 = vld [vmem:[#allocation2 + $0x770] sm:$0xff]
    %v262 = vld [vmem:[#allocation2 + $0x778] sm:$0xff]
    %v263 = vld [vmem:[#allocation2 + $0x780] sm:$0xff]
    %v264 = vld [vmem:[#allocation2 + $0x788] sm:$0xff]
    %v265 = vld [vmem:[#allocation2 + $0x790] sm:$0xff]
    %v266 = vld [vmem:[#allocation2 + $0x798] sm:$0xff]
    %v267 = vld [vmem:[#allocation2 + $0x7a0] sm:$0xff]
    %v268 = vld [vmem:[#allocation2 + $0x7a8] sm:$0xff]
    %v269 = vld [vmem:[#allocation2 + $0x7b0] sm:$0xff]
    %v270 = vld [vmem:[#allocation2 + $0x7b8] sm:$0xff]
    %v271 = vld [vmem:[#allocation2 + $0x7c0] sm:$0xff]
    %v272 = vld [vmem:[#allocation2 + $0x7c8] sm:$0xff]
    %v273 = vld [vmem:[#allocation2 + $0x7d0] sm:$0xff]
    %v274 = vld [vmem:[#allocation2 + $0x7d8] sm:$0xff]
    %v275 = vld [vmem:[#allocation2 + $0x7e0] sm:$0xff]
    %v276 = vld [vmem:[#allocation2 + $0x7e8] sm:$0xff]
    %v277 = vld [vmem:[#allocation2 + $0x7f0] sm:$0xff]
    %v278 = vld [vmem:[#allocation2 + $0x7f8] sm:$0xff]
    %v279 = vld [vmem:[#allocation2 + $0x800] sm:$0xff]
    %v280 = vld [vmem:[#allocation2 + $0x808] sm:$0xff]
    %v281 = vld [vmem:[#allocation2 + $0x810] sm:$0xff]
    %v282 = vld [vmem:[#allocation2 + $0x818] sm:$0xff]
    %v283 = vld [vmem:[#allocation2 + $0x820] sm:$0xff]
    %v284 = vld [vmem:[#allocation2 + $0x828] sm:$0xff]
    %v285 = vld [vmem:[#allocation2 + $0x830] sm:$0xff]
    %v286 = vld [vmem:[#allocation2 + $0x838] sm:$0xff]
    %v287 = vld [vmem:[#allocation2 + $0x840] sm:$0xff]
    %v288 = vld [vmem:[#allocation2 + $0x848] sm:$0xff]
    %v289 = vld [vmem:[#allocation2 + $0x850] sm:$0xff]
    %v290 = vld [vmem:[#allocation2 + $0x858] sm:$0xff]
    %v291 = vld [vmem:[#allocation2 + $0x860] sm:$0xff]
    %v292 = vld [vmem:[#allocation2 + $0x868] sm:$0xff]
    %v293 = vld [vmem:[#allocation2 + $0x870] sm:$0xff]
    %v294 = vld [vmem:[#allocation2 + $0x878] sm:$0xff]
    %v295 = vld [vmem:[#allocation2 + $0x880] sm:$0xff]
    %v296 = vld [vmem:[#allocation2 + $0x888] sm:$0xff]
    %v297 = vld [vmem:[#allocation2 + $0x890] sm:$0xff]
    %v298 = vld [vmem:[#allocation2 + $0x898] sm:$0xff]
    %v299 = vld [vmem:[#allocation2 + $0x8a0] sm:$0xff]
    %v300 = vld [vmem:[#allocation2 + $0x8a8] sm:$0xff]
    %v301 = vld [vmem:[#allocation2 + $0x8b0] sm:$0xff]
    %v302 = vld [vmem:[#allocation2 + $0x8b8] sm:$0xff]
    %v303 = vld [vmem:[#allocation2 + $0x8c0] sm:$0xff]
    %v304 = vld [vmem:[#allocation2 + $0x8c8] sm:$0xff]
    %v305 = vld [vmem:[#allocation2 + $0x8d0] sm:$0xff]
    %v306 = vld [vmem:[#allocation2 + $0x8d8] sm:$0xff]
    %v307 = vld [vmem:[#allocation2 + $0x8e0] sm:$0xff]
    %v308 = vld [vmem:[#allocation2 + $0x8e8] sm:$0xff]
    %v309 = vld [vmem:[#allocation2 + $0x8f0] sm:$0xff]
    %v310 = vld [vmem:[#allocation2 + $0x8f8] sm:$0xff]
    %v311 = vld [vmem:[#allocation2 + $0x900] sm:$0xff]
    %v312 = vld [vmem:[#allocation2 + $0x908] sm:$0xff]
    %v313 = vld [vmem:[#allocation2 + $0x910] sm:$0xff]
    %v314 = vld [vmem:[#allocation2 + $0x918] sm:$0xff]
    %v315 = vld [vmem:[#allocation2 + $0x920] sm:$0xff]
    %v316 = vld [vmem:[#allocation2 + $0x928] sm:$0xff]
    %v317 = vld [vmem:[#allocation2 + $0x930] sm:$0xff]
    %v318 = vld [vmem:[#allocation2 + $0x938] sm:$0xff]
    %v319 = vld [vmem:[#allocation2 + $0x940] sm:$0xff]
    %v320 = vld [vmem:[#allocation2 + $0x948] sm:$0xff]
    %v321 = vld [vmem:[#allocation2 + $0x950] sm:$0xff]
    %v322 = vld [vmem:[#allocation2 + $0x958] sm:$0xff]
    %v323 = vld [vmem:[#allocation2 + $0x960] sm:$0xff]
    %v324 = vld [vmem:[#allocation2 + $0x968] sm:$0xff]
    %v325 = vld [vmem:[#allocation2 + $0x970] sm:$0xff]
    %v326 = vld [vmem:[#allocation2 + $0x978] sm:$0xff]
    %v327 = vld [vmem:[#allocation2 + $0x980] sm:$0xff]
    %v328 = vld [vmem:[#allocation2 + $0x988] sm:$0xff]
    %v329 = vld [vmem:[#allocation2 + $0x990] sm:$0xff]
    %v330 = vld [vmem:[#allocation2 + $0x998] sm:$0xff]
    %v331 = vld [vmem:[#allocation2 + $0x9a0] sm:$0xff]
    %v332 = vld [vmem:[#allocation2 + $0x9a8] sm:$0xff]
    %v333 = vld [vmem:[#allocation2 + $0x9b0] sm:$0xff]
    %v334 = vld [vmem:[#allocation2 + $0x9b8] sm:$0xff]
    %v335 = vld [vmem:[#allocation2 + $0x9c0] sm:$0xff]
    %v336 = vld [vmem:[#allocation2 + $0x9c8] sm:$0xff]
    %v337 = vld [vmem:[#allocation2 + $0x9d0] sm:$0xff]
    %v338 = vld [vmem:[#allocation2 + $0x9d8] sm:$0xff]
    %v339 = vld [vmem:[#allocation2 + $0x9e0] sm:$0xff]
    %v340 = vld [vmem:[#allocation2 + $0x9e8] sm:$0xff]
    %v341 = vld [vmem:[#allocation2 + $0x9f0] sm:$0xff]
    %v342 = vld [vmem:[#allocation2 + $0x9f8] sm:$0xff]
    %v343 = vld [vmem:[#allocation2 + $0xa00] sm:$0xff]
    %v344 = vld [vmem:[#allocation2 + $0xa08] sm:$0xff]
    %v345 = vld [vmem:[#allocation2 + $0xa10] sm:$0xff]
    %v346 = vld [vmem:[#allocation2 + $0xa18] sm:$0xff]
    %v347 = vld [vmem:[#allocation2 + $0xa20] sm:$0xff]
    %v348 = vld [vmem:[#allocation2 + $0xa28] sm:$0xff]
    %v349 = vld [vmem:[#allocation2 + $0xa30] sm:$0xff]
    %v350 = vld [vmem:[#allocation2 + $0xa38] sm:$0xff]
    %v351 = vld [vmem:[#allocation2 + $0xa40] sm:$0xff]
    %v352 = vld [vmem:[#allocation2 + $0xa48] sm:$0xff]
    %v353 = vld [vmem:[#allocation2 + $0xa50] sm:$0xff]
    %v354 = vld [vmem:[#allocation2 + $0xa58] sm:$0xff]
    %v355 = vld [vmem:[#allocation2 + $0xa60] sm:$0xff]
    %v356 = vld [vmem:[#allocation2 + $0xa68] sm:$0xff]
    %v357 = vld [vmem:[#allocation2 + $0xa70] sm:$0xff]
    %v358 = vld [vmem:[#allocation2 + $0xa78] sm:$0xff]
    %v359 = vld [vmem:[#allocation2 + $0xa80] sm:$0xff]
    %v360 = vld [vmem:[#allocation2 + $0xa88] sm:$0xff]
    %v361 = vld [vmem:[#allocation2 + $0xa90] sm:$0xff]
    %v362 = vld [vmem:[#allocation2 + $0xa98] sm:$0xff]
    %v363 = vld [vmem:[#allocation2 + $0xaa0] sm:$0xff]
    %v364 = vld [vmem:[#allocation2 + $0xaa8] sm:$0xff]
    %v365 = vld [vmem:[#allocation2 + $0xab0] sm:$0xff]
    %v366 = vld [vmem:[#allocation2 + $0xab8] sm:$0xff]
    %v367 = vld [vmem:[#allocation2 + $0xac0] sm:$0xff]
    %v368 = vld [vmem:[#allocation2 + $0xac8] sm:$0xff]
    %v369 = vld [vmem:[#allocation2 + $0xad0] sm:$0xff]
    %v370 = vld [vmem:[#allocation2 + $0xad8] sm:$0xff]
    %v371 = vld [vmem:[#allocation2 + $0xae0] sm:$0xff]
    %v372 = vld [vmem:[#allocation2 + $0xae8] sm:$0xff]
    %v373 = vld [vmem:[#allocation2 + $0xaf0] sm:$0xff]
    %v374 = vld [vmem:[#allocation2 + $0xaf8] sm:$0xff]
    %v375 = vld [vmem:[#allocation2 + $0xb00] sm:$0xff]
    %v376 = vld [vmem:[#allocation2 + $0xb08] sm:$0xff]
    %v377 = vld [vmem:[#allocation2 + $0xb10] sm:$0xff]
    %v378 = vld [vmem:[#allocation2 + $0xb18] sm:$0xff]
    %v379 = vld [vmem:[#allocation2 + $0xb20] sm:$0xff]
    %v380 = vld [vmem:[#allocation2 + $0xb28] sm:$0xff]
    %v381 = vld [vmem:[#allocation2 + $0xb30] sm:$0xff]
    %v382 = vld [vmem:[#allocation2 + $0xb38] sm:$0xff]
    %v383 = vld [vmem:[#allocation2 + $0xb40] sm:$0xff]
    %v384 = vld [vmem:[#allocation2 + $0xb48] sm:$0xff]
    %v385 = vld [vmem:[#allocation2 + $0xb50] sm:$0xff]
    %v386 = vld [vmem:[#allocation2 + $0xb58] sm:$0xff]
    %v387 = vld [vmem:[#allocation2 + $0xb60] sm:$0xff]
    %v388 = vld [vmem:[#allocation2 + $0xb68] sm:$0xff]
    %v389 = vld [vmem:[#allocation2 + $0xb70] sm:$0xff]
    %v390 = vld [vmem:[#allocation2 + $0xb78] sm:$0xff]
    %v391 = vld [vmem:[#allocation2 + $0xb80] sm:$0xff]
    %v392 = vld [vmem:[#allocation2 + $0xb88] sm:$0xff]
    %v393 = vld [vmem:[#allocation2 + $0xb90] sm:$0xff]
    %v394 = vld [vmem:[#allocation2 + $0xb98] sm:$0xff]
    %v395 = vld [vmem:[#allocation2 + $0xba0] sm:$0xff]
    %v396 = vld [vmem:[#allocation2 + $0xba8] sm:$0xff]
    %v397 = vld [vmem:[#allocation2 + $0xbb0] sm:$0xff]
    %v398 = vld [vmem:[#allocation2 + $0xbb8] sm:$0xff]
    %v399 = vld [vmem:[#allocation2 + $0xbc0] sm:$0xff]
    %v400 = vld [vmem:[#allocation2 + $0xbc8] sm:$0xff]
    %v401 = vld [vmem:[#allocation2 + $0xbd0] sm:$0xff]
    %v402 = vld [vmem:[#allocation2 + $0xbd8] sm:$0xff]
    %v403 = vld [vmem:[#allocation2 + $0xbe0] sm:$0xff]
    %v404 = vld [vmem:[#allocation2 + $0xbe8] sm:$0xff]
    %v405 = vld [vmem:[#allocation2 + $0xbf0] sm:$0xff]
    %v406 = vld [vmem:[#allocation2 + $0xbf8] sm:$0xff]
    %v407 = vld [vmem:[#allocation2 + $0xc00] sm:$0xff]
    %v408 = vld [vmem:[#allocation2 + $0xc08] sm:$0xff]
    %v409 = vld [vmem:[#allocation2 + $0xc10] sm:$0xff]
    %v410 = vld [vmem:[#allocation2 + $0xc18] sm:$0xff]
    %v411 = vld [vmem:[#allocation2 + $0xc20] sm:$0xff]
    %v412 = vld [vmem:[#allocation2 + $0xc28] sm:$0xff]
    %v413 = vld [vmem:[#allocation2 + $0xc30] sm:$0xff]
    %v414 = vld [vmem:[#allocation2 + $0xc38] sm:$0xff]
    %v415 = vld [vmem:[#allocation2 + $0xc40] sm:$0xff]
    %v416 = vld [vmem:[#allocation2 + $0xc48] sm:$0xff]
    %v417 = vld [vmem:[#allocation2 + $0xc50] sm:$0xff]
    %v418 = vld [vmem:[#allocation2 + $0xc58] sm:$0xff]
    %v419 = vld [vmem:[#allocation2 + $0xc60] sm:$0xff]
    %v420 = vld [vmem:[#allocation2 + $0xc68] sm:$0xff]
    %v421 = vld [vmem:[#allocation2 + $0xc70] sm:$0xff]
    %v422 = vld [vmem:[#allocation2 + $0xc78] sm:$0xff]
    %v423 = vld [vmem:[#allocation2 + $0xc80] sm:$0xff]
    %v424 = vld [vmem:[#allocation2 + $0xc88] sm:$0xff]
    %v425 = vld [vmem:[#allocation2 + $0xc90] sm:$0xff]
    %v426 = vld [vmem:[#allocation2 + $0xc98] sm:$0xff]
    %v427 = vld [vmem:[#allocation2 + $0xca0] sm:$0xff]
    %v428 = vld [vmem:[#allocation2 + $0xca8] sm:$0xff]
    %v429 = vld [vmem:[#allocation2 + $0xcb0] sm:$0xff]
    %v430 = vld [vmem:[#allocation2 + $0xcb8] sm:$0xff]
    %v431 = vld [vmem:[#allocation2 + $0xcc0] sm:$0xff]
    %v432 = vld [vmem:[#allocation2 + $0xcc8] sm:$0xff]
    %v433 = vld [vmem:[#allocation2 + $0xcd0] sm:$0xff]
    %v434 = vld [vmem:[#allocation2 + $0xcd8] sm:$0xff]
    %v435 = vld [vmem:[#allocation2 + $0xce0] sm:$0xff]
    %v436 = vld [vmem:[#allocation2 + $0xce8] sm:$0xff]
    %v437 = vld [vmem:[#allocation2 + $0xcf0] sm:$0xff]
    %v438 = vld [vmem:[#allocation2 + $0xcf8] sm:$0xff]
    %v439 = vadd.f32 %v23, 3.0
    %v440 = vadd.f32 %v24, 3.0
    %v441 = vadd.f32 %v25, 3.0
    %v442 = vadd.f32 %v26, 3.0
    %v443 = vadd.f32 %v27, 3.0
    %v444 = vadd.f32 %v28, 3.0
    %v445 = vadd.f32 %v29, 3.0
    %v446 = vadd.f32 %v30, 3.0
    %v447 = vadd.f32 %v31, 3.0
    %v448 = vadd.f32 %v32, 3.0
    %v449 = vadd.f32 %v33, 3.0
    %v450 = vadd.f32 %v34, 3.0
    %v451 = vadd.f32 %v35, 3.0
    %v452 = vadd.f32 %v36, 3.0
    %v453 = vadd.f32 %v37, 3.0
    %v454 = vadd.f32 %v38, 3.0
    %v455 = vadd.f32 %v39, 3.0
    %v456 = vadd.f32 %v40, 3.0
    %v457 = vadd.f32 %v41, 3.0
    %v458 = vadd.f32 %v42, 3.0
    %v459 = vadd.f32 %v43, 3.0
    %v460 = vadd.f32 %v44, 3.0
    %v461 = vadd.f32 %v45, 3.0
    %v462 = vadd.f32 %v46, 3.0
    %v463 = vadd.f32 %v47, 3.0
    %v464 = vadd.f32 %v48, 3.0
    %v465 = vadd.f32 %v49, 3.0
    %v466 = vadd.f32 %v50, 3.0
    %v467 = vadd.f32 %v51, 3.0
    %v468 = vadd.f32 %v52, 3.0
    %v469 = vadd.f32 %v53, 3.0
    %v470 = vadd.f32 %v54, 3.0
    %v471 = vadd.f32 %v55, 3.0
    %v472 = vadd.f32 %v56, 3.0
    %v473 = vadd.f32 %v57, 3.0
    %v474 = vadd.f32 %v58, 3.0
    %v475 = vadd.f32 %v59, 3.0
    %v476 = vadd.f32 %v60, 3.0
    %v477 = vadd.f32 %v61, 3.0
    %v478 = vadd.f32 %v62, 3.0
    %v479 = vadd.f32 %v63, 3.0
    %v480 = vadd.f32 %v64, 3.0
    %v481 = vadd.f32 %v65, 3.0
    %v482 = vadd.f32 %v66, 3.0
    %v483 = vadd.f32 %v67, 3.0
    %v484 = vadd.f32 %v68, 3.0
    %v485 = vadd.f32 %v69, 3.0
    %v486 = vadd.f32 %v70, 3.0
    %v487 = vadd.f32 %v71, 3.0
    %v488 = vadd.f32 %v72, 3.0
    %v489 = vadd.f32 %v73, 3.0
    %v490 = vadd.f32 %v74, 3.0
    %v491 = vadd.f32 %v75, 3.0
    %v492 = vadd.f32 %v76, 3.0
    %v493 = vadd.f32 %v77, 3.0
    %v494 = vadd.f32 %v78, 3.0
    %v495 = vadd.f32 %v79, 3.0
    %v496 = vadd.f32 %v80, 3.0
    %v497 = vadd.f32 %v81, 3.0
    %v498 = vadd.f32 %v82, 3.0
    %v499 = vadd.f32 %v83, 3.0
    %v500 = vadd.f32 %v84, 3.0
    %v501 = vadd.f32 %v85, 3.0
    %v502 = vadd.f32 %v86, 3.0
    %v503 = vadd.f32 %v87, 3.0
    %v504 = vadd.f32 %v88, 3.0
    %v505 = vadd.f32 %v89, 3.0
    %v506 = vadd.f32 %v90, 3.0
    %v507 = vadd.f32 %v91, 3.0
    %v508 = vadd.f32 %v92, 3.0
    %v509 = vadd.f32 %v93, 3.0
    %v510 = vadd.f32 %v94, 3.0
    %v511 = vadd.f32 %v95, 3.0
    %v512 = vadd.f32 %v96, 3.0
    %v513 = vadd.f32 %v97, 3.0
    %v514 = vadd.f32 %v98, 3.0
    %v515 = vadd.f32 %v99, 3.0
    %v516 = vadd.f32 %v100, 3.0
    %v517 = vadd.f32 %v101, 3.0
    %v518 = vadd.f32 %v102, 3.0
    %v519 = vadd.f32 %v103, 3.0
    %v520 = vadd.f32 %v104, 3.0
    %v521 = vadd.f32 %v105, 3.0
    %v522 = vadd.f32 %v106, 3.0
    %v523 = vadd.f32 %v107, 3.0
    %v524 = vadd.f32 %v108, 3.0
    %v525 = vadd.f32 %v109, 3.0
    %v526 = vadd.f32 %v110, 3.0
    %v527 = vadd.f32 %v111, 3.0
    %v528 = vadd.f32 %v112, 3.0
    %v529 = vadd.f32 %v113, 3.0
    %v530 = vadd.f32 %v114, 3.0
    %v531 = vadd.f32 %v115, 3.0
    %v532 = vadd.f32 %v116, 3.0
    %v533 = vadd.f32 %v117, 3.0
    %v534 = vadd.f32 %v118, 3.0
    %v535 = vadd.f32 %v119, 3.0
    %v536 = vadd.f32 %v120, 3.0
    %v537 = vadd.f32 %v121, 3.0
    %v538 = vadd.f32 %v122, 3.0
    %v539 = vadd.f32 %v123, 3.0
    %v540 = vadd.f32 %v124, 3.0
    %v541 = vadd.f32 %v125, 3.0
    %v542 = vadd.f32 %v126, 3.0
    %v543 = vadd.f32 %v127, 3.0
    %v544 = vadd.f32 %v128, 3.0
    %v545 = vadd.f32 %v129, 3.0
    %v546 = vadd.f32 %v130, 3.0
    %v547 = vadd.f32 %v131, 3.0
    %v548 = vadd.f32 %v132, 3.0
    %v549 = vadd.f32 %v133, 3.0
    %v550 = vadd.f32 %v134, 3.0
    %v551 = vadd.f32 %v135, 3.0
    %v552 = vadd.f32 %v136, 3.0
    %v553 = vadd.f32 %v137, 3.0
    %v554 = vadd.f32 %v138, 3.0
    %v555 = vadd.f32 %v139, 3.0
    %v556 = vadd.f32 %v140, 3.0
    %v557 = vadd.f32 %v141, 3.0
    %v558 = vadd.f32 %v142, 3.0
    %v559 = vadd.f32 %v143, 3.0
    %v560 = vadd.f32 %v144, 3.0
    %v561 = vadd.f32 %v145, 3.0
    %v562 = vadd.f32 %v146, 3.0
    %v563 = vadd.f32 %v147, 3.0
    %v564 = vadd.f32 %v148, 3.0
    %v565 = vadd.f32 %v149, 3.0
    %v566 = vadd.f32 %v150, 3.0
    %v567 = vadd.f32 %v151, 3.0
    %v568 = vadd.f32 %v152, 3.0
    %v569 = vadd.f32 %v153, 3.0
    %v570 = vadd.f32 %v154, 3.0
    %v571 = vadd.f32 %v155, 3.0
    %v572 = vadd.f32 %v156, 3.0
    %v573 = vadd.f32 %v157, 3.0
    %v574 = vadd.f32 %v158, 3.0
    %v575 = vadd.f32 %v159, 3.0
    %v576 = vadd.f32 %v160, 3.0
    %v577 = vadd.f32 %v161, 3.0
    %v578 = vadd.f32 %v162, 3.0
    %v579 = vadd.f32 %v163, 3.0
    %v580 = vadd.f32 %v164, 3.0
    %v581 = vadd.f32 %v165, 3.0
    %v582 = vadd.f32 %v166, 3.0
    %v583 = vadd.f32 %v167, 3.0
    %v584 = vadd.f32 %v168, 3.0
    %v585 = vadd.f32 %v169, 3.0
    %v586 = vadd.f32 %v170, 3.0
    %v587 = vadd.f32 %v171, 3.0
    %v588 = vadd.f32 %v172, 3.0
    %v589 = vadd.f32 %v173, 3.0
    %v590 = vadd.f32 %v174, 3.0
    %v591 = vadd.f32 %v175, 3.0
    %v592 = vadd.f32 %v176, 3.0
    %v593 = vadd.f32 %v177, 3.0
    %v594 = vadd.f32 %v178, 3.0
    %v595 = vadd.f32 %v179, 3.0
    %v596 = vadd.f32 %v180, 3.0
    %v597 = vadd.f32 %v181, 3.0
    %v598 = vadd.f32 %v182, 3.0
    %v599 = vadd.f32 %v183, 3.0
    %v600 = vadd.f32 %v184, 3.0
    %v601 = vadd.f32 %v185, 3.0
    %v602 = vadd.f32 %v186, 3.0
    %v603 = vadd.f32 %v187, 3.0
    %v604 = vadd.f32 %v188, 3.0
    %v605 = vadd.f32 %v189, 3.0
    %v606 = vadd.f32 %v190, 3.0
    %v607 = vadd.f32 %v191, 3.0
    %v608 = vadd.f32 %v192, 3.0
    %v609 = vadd.f32 %v193, 3.0
    %v610 = vadd.f32 %v194, 3.0
    %v611 = vadd.f32 %v195, 3.0
    %v612 = vadd.f32 %v196, 3.0
    %v613 = vadd.f32 %v197, 3.0
    %v614 = vadd.f32 %v198, 3.0
    %v615 = vadd.f32 %v199, 3.0
    %v616 = vadd.f32 %v200, 3.0
    %v617 = vadd.f32 %v201, 3.0
    %v618 = vadd.f32 %v202, 3.0
    %v619 = vadd.f32 %v203, 3.0
    %v620 = vadd.f32 %v204, 3.0
    %v621 = vadd.f32 %v205, 3.0
    %v622 = vadd.f32 %v206, 3.0
    %v623 = vadd.f32 %v207, 3.0
    %v624 = vadd.f32 %v208, 3.0
    %v625 = vadd.f32 %v209, 3.0
    %v626 = vadd.f32 %v210, 3.0
    %v627 = vadd.f32 %v211, 3.0
    %v628 = vadd.f32 %v212, 3.0
    %v629 = vadd.f32 %v213, 3.0
    %v630 = vadd.f32 %v214, 3.0
    %v631 = vadd.f32 %v215, 3.0
    %v632 = vadd.f32 %v216, 3.0
    %v633 = vadd.f32 %v217, 3.0
    %v634 = vadd.f32 %v218, 3.0
    %v635 = vadd.f32 %v219, 3.0
    %v636 = vadd.f32 %v220, 3.0
    %v637 = vadd.f32 %v221, 3.0
    %v638 = vadd.f32 %v222, 3.0
    %v639 = vadd.f32 %v223, 3.0
    %v640 = vadd.f32 %v224, 3.0
    %v641 = vadd.f32 %v225, 3.0
    %v642 = vadd.f32 %v226, 3.0
    %v643 = vadd.f32 %v227, 3.0
    %v644 = vadd.f32 %v228, 3.0
    %v645 = vadd.f32 %v229, 3.0
    %v646 = vadd.f32 %v230, 3.0
    %v647 = vadd.f32 %v231, 3.0
    %v648 = vadd.f32 %v232, 3.0
    %v649 = vadd.f32 %v233, 3.0
    %v650 = vadd.f32 %v234, 3.0
    %v651 = vadd.f32 %v235, 3.0
    %v652 = vadd.f32 %v236, 3.0
    %v653 = vadd.f32 %v237, 3.0
    %v654 = vadd.f32 %v238, 3.0
    %v655 = vadd.f32 %v239, 3.0
    %v656 = vadd.f32 %v240, 3.0
    %v657 = vadd.f32 %v241, 3.0
    %v658 = vadd.f32 %v242, 3.0
    %v659 = vadd.f32 %v243, 3.0
    %v660 = vadd.f32 %v244, 3.0
    %v661 = vadd.f32 %v245, 3.0
    %v662 = vadd.f32 %v246, 3.0
    %v663 = vadd.f32 %v247, 3.0
    %v664 = vadd.f32 %v248, 3.0
    %v665 = vadd.f32 %v249, 3.0
    %v666 = vadd.f32 %v250, 3.0
    %v667 = vadd.f32 %v251, 3.0
    %v668 = vadd.f32 %v252, 3.0
    %v669 = vadd.f32 %v253, 3.0
    %v670 = vadd.f32 %v254, 3.0
    %v671 = vadd.f32 %v255, 3.0
    %v672 = vadd.f32 %v256, 3.0
    %v673 = vadd.f32 %v257, 3.0
    %v674 = vadd.f32 %v258, 3.0
    %v675 = vadd.f32 %v259, 3.0
    %v676 = vadd.f32 %v260, 3.0
    %v677 = vadd.f32 %v261, 3.0
    %v678 = vadd.f32 %v262, 3.0
    %v679 = vadd.f32 %v263, 3.0
    %v680 = vadd.f32 %v264, 3.0
    %v681 = vadd.f32 %v265, 3.0
    %v682 = vadd.f32 %v266, 3.0
    %v683 = vadd.f32 %v267, 3.0
    %v684 = vadd.f32 %v268, 3.0
    %v685 = vadd.f32 %v269, 3.0
    %v686 = vadd.f32 %v270, 3.0
    %v687 = vadd.f32 %v271, 3.0
    %v688 = vadd.f32 %v272, 3.0
    %v689 = vadd.f32 %v273, 3.0
    %v690 = vadd.f32 %v274, 3.0
    %v691 = vadd.f32 %v275, 3.0
    %v692 = vadd.f32 %v276, 3.0
    %v693 = vadd.f32 %v277, 3.0
    %v694 = vadd.f32 %v278, 3.0
    %v695 = vadd.f32 %v279, 3.0
    %v696 = vadd.f32 %v280, 3.0
    %v697 = vadd.f32 %v281, 3.0
    %v698 = vadd.f32 %v282, 3.0
    %v699 = vadd.f32 %v283, 3.0
    %v700 = vadd.f32 %v284, 3.0
    %v701 = vadd.f32 %v285, 3.0
    %v702 = vadd.f32 %v286, 3.0
    %v703 = vadd.f32 %v287, 3.0
    %v704 = vadd.f32 %v288, 3.0
    %v705 = vadd.f32 %v289, 3.0
    %v706 = vadd.f32 %v290, 3.0
    %v707 = vadd.f32 %v291, 3.0
    %v708 = vadd.f32 %v292, 3.0
    %v709 = vadd.f32 %v293, 3.0
    %v710 = vadd.f32 %v294, 3.0
    %v711 = vadd.f32 %v295, 3.0
    %v712 = vadd.f32 %v296, 3.0
    %v713 = vadd.f32 %v297, 3.0
    %v714 = vadd.f32 %v298, 3.0
    %v715 = vadd.f32 %v299, 3.0
    %v716 = vadd.f32 %v300, 3.0
    %v717 = vadd.f32 %v301, 3.0
    %v718 = vadd.f32 %v302, 3.0
    %v719 = vadd.f32 %v303, 3.0
    %v720 = vadd.f32 %v304, 3.0
    %v721 = vadd.f32 %v305, 3.0
    %v722 = vadd.f32 %v306, 3.0
    %v723 = vadd.f32 %v307, 3.0
    %v724 = vadd.f32 %v308, 3.0
    %v725 = vadd.f32 %v309, 3.0
    %v726 = vadd.f32 %v310, 3.0
    %v727 = vadd.f32 %v311, 3.0
    %v728 = vadd.f32 %v312, 3.0
    %v729 = vadd.f32 %v313, 3.0
    %v730 = vadd.f32 %v314, 3.0
    %v731 = vadd.f32 %v315, 3.0
    %v732 = vadd.f32 %v316, 3.0
    %v733 = vadd.f32 %v317, 3.0
    %v734 = vadd.f32 %v318, 3.0
    %v735 = vadd.f32 %v319, 3.0
    %v736 = vadd.f32 %v320, 3.0
    %v737 = vadd.f32 %v321, 3.0
    %v738 = vadd.f32 %v322, 3.0
    %v739 = vadd.f32 %v323, 3.0
    %v740 = vadd.f32 %v324, 3.0
    %v741 = vadd.f32 %v325, 3.0
    %v742 = vadd.f32 %v326, 3.0
    %v743 = vadd.f32 %v327, 3.0
    %v744 = vadd.f32 %v328, 3.0
    %v745 = vadd.f32 %v329, 3.0
    %v746 = vadd.f32 %v330, 3.0
    %v747 = vadd.f32 %v331, 3.0
    %v748 = vadd.f32 %v332, 3.0
    %v749 = vadd.f32 %v333, 3.0
    %v750 = vadd.f32 %v334, 3.0
    %v751 = vadd.f32 %v335, 3.0
    %v752 = vadd.f32 %v336, 3.0
    %v753 = vadd.f32 %v337, 3.0
    %v754 = vadd.f32 %v338, 3.0
    %v755 = vadd.f32 %v339, 3.0
    %v756 = vadd.f32 %v340, 3.0
    %v757 = vadd.f32 %v341, 3.0
    %v758 = vadd.f32 %v342, 3.0
    %v759 = vadd.f32 %v343, 3.0
    %v760 = vadd.f32 %v344, 3.0
    %v761 = vadd.f32 %v345, 3.0
    %v762 = vadd.f32 %v346, 3.0
    %v763 = vadd.f32 %v347, 3.0
    %v764 = vadd.f32 %v348, 3.0
    %v765 = vadd.f32 %v349, 3.0
    %v766 = vadd.f32 %v350, 3.0
    %v767 = vadd.f32 %v351, 3.0
    %v768 = vadd.f32 %v352, 3.0
    %v769 = vadd.f32 %v353, 3.0
    %v770 = vadd.f32 %v354, 3.0
    %v771 = vadd.f32 %v355, 3.0
    %v772 = vadd.f32 %v356, 3.0
    %v773 = vadd.f32 %v357, 3.0
    %v774 = vadd.f32 %v358, 3.0
    %v775 = vadd.f32 %v359, 3.0
    %v776 = vadd.f32 %v360, 3.0
    %v777 = vadd.f32 %v361, 3.0
    %v778 = vadd.f32 %v362, 3.0
    %v779 = vadd.f32 %v363, 3.0
    %v780 = vadd.f32 %v364, 3.0
    %v781 = vadd.f32 %v365, 3.0
    %v782 = vadd.f32 %v366, 3.0
    %v783 = vadd.f32 %v367, 3.0
    %v784 = vadd.f32 %v368, 3.0
    %v785 = vadd.f32 %v369, 3.0
    %v786 = vadd.f32 %v370, 3.0
    %v787 = vadd.f32 %v371, 3.0
    %v788 = vadd.f32 %v372, 3.0
    %v789 = vadd.f32 %v373, 3.0
    %v790 = vadd.f32 %v374, 3.0
    %v791 = vadd.f32 %v375, 3.0
    %v792 = vadd.f32 %v376, 3.0
    %v793 = vadd.f32 %v377, 3.0
    %v794 = vadd.f32 %v378, 3.0
    %v795 = vadd.f32 %v379, 3.0
    %v796 = vadd.f32 %v380, 3.0
    %v797 = vadd.f32 %v381, 3.0
    %v798 = vadd.f32 %v382, 3.0
    %v799 = vadd.f32 %v383, 3.0
    %v800 = vadd.f32 %v384, 3.0
    %v801 = vadd.f32 %v385, 3.0
    %v802 = vadd.f32 %v386, 3.0
    %v803 = vadd.f32 %v387, 3.0
    %v804 = vadd.f32 %v388, 3.0
    %v805 = vadd.f32 %v389, 3.0
    %v806 = vadd.f32 %v390, 3.0
    %v807 = vadd.f32 %v391, 3.0
    %v808 = vadd.f32 %v392, 3.0
    %v809 = vadd.f32 %v393, 3.0
    %v810 = vadd.f32 %v394, 3.0
    %v811 = vadd.f32 %v395, 3.0
    %v812 = vadd.f32 %v396, 3.0
    %v813 = vadd.f32 %v397, 3.0
    %v814 = vadd.f32 %v398, 3.0
    %v815 = vadd.f32 %v399, 3.0
    %v816 = vadd.f32 %v400, 3.0
    %v817 = vadd.f32 %v401, 3.0
    %v818 = vadd.f32 %v402, 3.0
    %v819 = vadd.f32 %v403, 3.0
    %v820 = vadd.f32 %v404, 3.0
    %v821 = vadd.f32 %v405, 3.0
    %v822 = vadd.f32 %v406, 3.0
    %v823 = vadd.f32 %v407, 3.0
    %v824 = vadd.f32 %v408, 3.0
    %v825 = vadd.f32 %v409, 3.0
    %v826 = vadd.f32 %v410, 3.0
    %v827 = vadd.f32 %v411, 3.0
    %v828 = vadd.f32 %v412, 3.0
    %v829 = vadd.f32 %v413, 3.0
    %v830 = vadd.f32 %v414, 3.0
    %v831 = vadd.f32 %v415, 3.0
    %v832 = vadd.f32 %v416, 3.0
    %v833 = vadd.f32 %v417, 3.0
    %v834 = vadd.f32 %v418, 3.0
    %v835 = vadd.f32 %v419, 3.0
    %v836 = vadd.f32 %v420, 3.0
    %v837 = vadd.f32 %v421, 3.0
    %v838 = vadd.f32 %v422, 3.0
    %v839 = vadd.f32 %v423, 3.0
    %v840 = vadd.f32 %v424, 3.0
    %v841 = vadd.f32 %v425, 3.0
    %v842 = vadd.f32 %v426, 3.0
    %v843 = vadd.f32 %v427, 3.0
    %v844 = vadd.f32 %v428, 3.0
    %v845 = vadd.f32 %v429, 3.0
    %v846 = vadd.f32 %v430, 3.0
    %v847 = vadd.f32 %v431, 3.0
    %v848 = vadd.f32 %v432, 3.0
    %v849 = vadd.f32 %v433, 3.0
    %v850 = vadd.f32 %v434, 3.0
    %v851 = vadd.f32 %v435, 3.0
    %v852 = vadd.f32 %v436, 3.0
    %v853 = vadd.f32 %v437, 3.0
    %v854 = vadd.f32 %v438, 3.0
    %v855 = vmax.f32 %v439, 0.0
    %v856 = vmax.f32 %v440, 0.0
    %v857 = vmax.f32 %v441, 0.0
    %v858 = vmax.f32 %v442, 0.0
    %v859 = vmax.f32 %v443, 0.0
    %v860 = vmax.f32 %v444, 0.0
    %v861 = vmax.f32 %v445, 0.0
    %v862 = vmax.f32 %v446, 0.0
    %v863 = vmax.f32 %v447, 0.0
    %v864 = vmax.f32 %v448, 0.0
    %v865 = vmax.f32 %v449, 0.0
    %v866 = vmax.f32 %v450, 0.0
    %v867 = vmax.f32 %v451, 0.0
    %v868 = vmax.f32 %v452, 0.0
    %v869 = vmax.f32 %v453, 0.0
    %v870 = vmax.f32 %v454, 0.0
    %v871 = vmax.f32 %v455, 0.0
    %v872 = vmax.f32 %v456, 0.0
    %v873 = vmax.f32 %v457, 0.0
    %v874 = vmax.f32 %v458, 0.0
    %v875 = vmax.f32 %v459, 0.0
    %v876 = vmax.f32 %v460, 0.0
    %v877 = vmax.f32 %v461, 0.0
    %v878 = vmax.f32 %v462, 0.0
    %v879 = vmax.f32 %v463, 0.0
    %v880 = vmax.f32 %v464, 0.0
    %v881 = vmax.f32 %v465, 0.0
    %v882 = vmax.f32 %v466, 0.0
    %v883 = vmax.f32 %v467, 0.0
    %v884 = vmax.f32 %v468, 0.0
    %v885 = vmax.f32 %v469, 0.0
    %v886 = vmax.f32 %v470, 0.0
    %v887 = vmax.f32 %v471, 0.0
    %v888 = vmax.f32 %v472, 0.0
    %v889 = vmax.f32 %v473, 0.0
    %v890 = vmax.f32 %v474, 0.0
    %v891 = vmax.f32 %v475, 0.0
    %v892 = vmax.f32 %v476, 0.0
    %v893 = vmax.f32 %v477, 0.0
    %v894 = vmax.f32 %v478, 0.0
    %v895 = vmax.f32 %v479, 0.0
    %v896 = vmax.f32 %v480, 0.0
    %v897 = vmax.f32 %v481, 0.0
    %v898 = vmax.f32 %v482, 0.0
    %v899 = vmax.f32 %v483, 0.0
    %v900 = vmax.f32 %v484, 0.0
    %v901 = vmax.f32 %v485, 0.0
    %v902 = vmax.f32 %v486, 0.0
    %v903 = vmax.f32 %v487, 0.0
    %v904 = vmax.f32 %v488, 0.0
    %v905 = vmax.f32 %v489, 0.0
    %v906 = vmax.f32 %v490, 0.0
    %v907 = vmax.f32 %v491, 0.0
    %v908 = vmax.f32 %v492, 0.0
    %v909 = vmax.f32 %v493, 0.0
    %v910 = vmax.f32 %v494, 0.0
    %v911 = vmax.f32 %v495, 0.0
    %v912 = vmax.f32 %v496, 0.0
    %v913 = vmax.f32 %v497, 0.0
    %v914 = vmax.f32 %v498, 0.0
    %v915 = vmax.f32 %v499, 0.0
    %v916 = vmax.f32 %v500, 0.0
    %v917 = vmax.f32 %v501, 0.0
    %v918 = vmax.f32 %v502, 0.0
    %v919 = vmax.f32 %v503, 0.0
    %v920 = vmax.f32 %v504, 0.0
    %v921 = vmax.f32 %v505, 0.0
    %v922 = vmax.f32 %v506, 0.0
    %v923 = vmax.f32 %v507, 0.0
    %v924 = vmax.f32 %v508, 0.0
    %v925 = vmax.f32 %v509, 0.0
    %v926 = vmax.f32 %v510, 0.0
    %v927 = vmax.f32 %v511, 0.0
    %v928 = vmax.f32 %v512, 0.0
    %v929 = vmax.f32 %v513, 0.0
    %v930 = vmax.f32 %v514, 0.0
    %v931 = vmax.f32 %v515, 0.0
    %v932 = vmax.f32 %v516, 0.0
    %v933 = vmax.f32 %v517, 0.0
    %v934 = vmax.f32 %v518, 0.0
    %v935 = vmax.f32 %v519, 0.0
    %v936 = vmax.f32 %v520, 0.0
    %v937 = vmax.f32 %v521, 0.0
    %v938 = vmax.f32 %v522, 0.0
    %v939 = vmax.f32 %v523, 0.0
    %v940 = vmax.f32 %v524, 0.0
    %v941 = vmax.f32 %v525, 0.0
    %v942 = vmax.f32 %v526, 0.0
    %v943 = vmax.f32 %v527, 0.0
    %v944 = vmax.f32 %v528, 0.0
    %v945 = vmax.f32 %v529, 0.0
    %v946 = vmax.f32 %v530, 0.0
    %v947 = vmax.f32 %v531, 0.0
    %v948 = vmax.f32 %v532, 0.0
    %v949 = vmax.f32 %v533, 0.0
    %v950 = vmax.f32 %v534, 0.0
    %v951 = vmax.f32 %v535, 0.0
    %v952 = vmax.f32 %v536, 0.0
    %v953 = vmax.f32 %v537, 0.0
    %v954 = vmax.f32 %v538, 0.0
    %v955 = vmax.f32 %v539, 0.0
    %v956 = vmax.f32 %v540, 0.0
    %v957 = vmax.f32 %v541, 0.0
    %v958 = vmax.f32 %v542, 0.0
    %v959 = vmax.f32 %v543, 0.0
    %v960 = vmax.f32 %v544, 0.0
    %v961 = vmax.f32 %v545, 0.0
    %v962 = vmax.f32 %v546, 0.0
    %v963 = vmax.f32 %v547, 0.0
    %v964 = vmax.f32 %v548, 0.0
    %v965 = vmax.f32 %v549, 0.0
    %v966 = vmax.f32 %v550, 0.0
    %v967 = vmax.f32 %v551, 0.0
    %v968 = vmax.f32 %v552, 0.0
    %v969 = vmax.f32 %v553, 0.0
    %v970 = vmax.f32 %v554, 0.0
    %v971 = vmax.f32 %v555, 0.0
    %v972 = vmax.f32 %v556, 0.0
    %v973 = vmax.f32 %v557, 0.0
    %v974 = vmax.f32 %v558, 0.0
    %v975 = vmax.f32 %v559, 0.0
    %v976 = vmax.f32 %v560, 0.0
    %v977 = vmax.f32 %v561, 0.0
    %v978 = vmax.f32 %v562, 0.0
    %v979 = vmax.f32 %v563, 0.0
    %v980 = vmax.f32 %v564, 0.0
    %v981 = vmax.f32 %v565, 0.0
    %v982 = vmax.f32 %v566, 0.0
    %v983 = vmax.f32 %v567, 0.0
    %v984 = vmax.f32 %v568, 0.0
    %v985 = vmax.f32 %v569, 0.0
    %v986 = vmax.f32 %v570, 0.0
    %v987 = vmax.f32 %v571, 0.0
    %v988 = vmax.f32 %v572, 0.0
    %v989 = vmax.f32 %v573, 0.0
    %v990 = vmax.f32 %v574, 0.0
    %v991 = vmax.f32 %v575, 0.0
    %v992 = vmax.f32 %v576, 0.0
    %v993 = vmax.f32 %v577, 0.0
    %v994 = vmax.f32 %v578, 0.0
    %v995 = vmax.f32 %v579, 0.0
    %v996 = vmax.f32 %v580, 0.0
    %v997 = vmax.f32 %v581, 0.0
    %v998 = vmax.f32 %v582, 0.0
    %v999 = vmax.f32 %v583, 0.0
    %v1000 = vmax.f32 %v584, 0.0
    %v1001 = vmax.f32 %v585, 0.0
    %v1002 = vmax.f32 %v586, 0.0
    %v1003 = vmax.f32 %v587, 0.0
    %v1004 = vmax.f32 %v588, 0.0
    %v1005 = vmax.f32 %v589, 0.0
    %v1006 = vmax.f32 %v590, 0.0
    %v1007 = vmax.f32 %v591, 0.0
    %v1008 = vmax.f32 %v592, 0.0
    %v1009 = vmax.f32 %v593, 0.0
    %v1010 = vmax.f32 %v594, 0.0
    %v1011 = vmax.f32 %v595, 0.0
    %v1012 = vmax.f32 %v596, 0.0
    %v1013 = vmax.f32 %v597, 0.0
    %v1014 = vmax.f32 %v598, 0.0
    %v1015 = vmax.f32 %v599, 0.0
    %v1016 = vmax.f32 %v600, 0.0
    %v1017 = vmax.f32 %v601, 0.0
    %v1018 = vmax.f32 %v602, 0.0
    %v1019 = vmax.f32 %v603, 0.0
    %v1020 = vmax.f32 %v604, 0.0
    %v1021 = vmax.f32 %v605, 0.0
    %v1022 = vmax.f32 %v606, 0.0
    %v1023 = vmax.f32 %v607, 0.0
    %v1024 = vmax.f32 %v608, 0.0
    %v1025 = vmax.f32 %v609, 0.0
    %v1026 = vmax.f32 %v610, 0.0
    %v1027 = vmax.f32 %v611, 0.0
    %v1028 = vmax.f32 %v612, 0.0
    %v1029 = vmax.f32 %v613, 0.0
    %v1030 = vmax.f32 %v614, 0.0
    %v1031 = vmax.f32 %v615, 0.0
    %v1032 = vmax.f32 %v616, 0.0
    %v1033 = vmax.f32 %v617, 0.0
    %v1034 = vmax.f32 %v618, 0.0
    %v1035 = vmax.f32 %v619, 0.0
    %v1036 = vmax.f32 %v620, 0.0
    %v1037 = vmax.f32 %v621, 0.0
    %v1038 = vmax.f32 %v622, 0.0
    %v1039 = vmax.f32 %v623, 0.0
    %v1040 = vmax.f32 %v624, 0.0
    %v1041 = vmax.f32 %v625, 0.0
    %v1042 = vmax.f32 %v626, 0.0
    %v1043 = vmax.f32 %v627, 0.0
    %v1044 = vmax.f32 %v628, 0.0
    %v1045 = vmax.f32 %v629, 0.0
    %v1046 = vmax.f32 %v630, 0.0
    %v1047 = vmax.f32 %v631, 0.0
    %v1048 = vmax.f32 %v632, 0.0
    %v1049 = vmax.f32 %v633, 0.0
    %v1050 = vmax.f32 %v634, 0.0
    %v1051 = vmax.f32 %v635, 0.0
    %v1052 = vmax.f32 %v636, 0.0
    %v1053 = vmax.f32 %v637, 0.0
    %v1054 = vmax.f32 %v638, 0.0
    %v1055 = vmax.f32 %v639, 0.0
    %v1056 = vmax.f32 %v640, 0.0
    %v1057 = vmax.f32 %v641, 0.0
    %v1058 = vmax.f32 %v642, 0.0
    %v1059 = vmax.f32 %v643, 0.0
    %v1060 = vmax.f32 %v644, 0.0
    %v1061 = vmax.f32 %v645, 0.0
    %v1062 = vmax.f32 %v646, 0.0
    %v1063 = vmax.f32 %v647, 0.0
    %v1064 = vmax.f32 %v648, 0.0
    %v1065 = vmax.f32 %v649, 0.0
    %v1066 = vmax.f32 %v650, 0.0
    %v1067 = vmax.f32 %v651, 0.0
    %v1068 = vmax.f32 %v652, 0.0
    %v1069 = vmax.f32 %v653, 0.0
    %v1070 = vmax.f32 %v654, 0.0
    %v1071 = vmax.f32 %v655, 0.0
    %v1072 = vmax.f32 %v656, 0.0
    %v1073 = vmax.f32 %v657, 0.0
    %v1074 = vmax.f32 %v658, 0.0
    %v1075 = vmax.f32 %v659, 0.0
    %v1076 = vmax.f32 %v660, 0.0
    %v1077 = vmax.f32 %v661, 0.0
    %v1078 = vmax.f32 %v662, 0.0
    %v1079 = vmax.f32 %v663, 0.0
    %v1080 = vmax.f32 %v664, 0.0
    %v1081 = vmax.f32 %v665, 0.0
    %v1082 = vmax.f32 %v666, 0.0
    %v1083 = vmax.f32 %v667, 0.0
    %v1084 = vmax.f32 %v668, 0.0
    %v1085 = vmax.f32 %v669, 0.0
    %v1086 = vmax.f32 %v670, 0.0
    %v1087 = vmax.f32 %v671, 0.0
    %v1088 = vmax.f32 %v672, 0.0
    %v1089 = vmax.f32 %v673, 0.0
    %v1090 = vmax.f32 %v674, 0.0
    %v1091 = vmax.f32 %v675, 0.0
    %v1092 = vmax.f32 %v676, 0.0
    %v1093 = vmax.f32 %v677, 0.0
    %v1094 = vmax.f32 %v678, 0.0
    %v1095 = vmax.f32 %v679, 0.0
    %v1096 = vmax.f32 %v680, 0.0
    %v1097 = vmax.f32 %v681, 0.0
    %v1098 = vmax.f32 %v682, 0.0
    %v1099 = vmax.f32 %v683, 0.0
    %v1100 = vmax.f32 %v684, 0.0
    %v1101 = vmax.f32 %v685, 0.0
    %v1102 = vmax.f32 %v686, 0.0
    %v1103 = vmax.f32 %v687, 0.0
    %v1104 = vmax.f32 %v688, 0.0
    %v1105 = vmax.f32 %v689, 0.0
    %v1106 = vmax.f32 %v690, 0.0
    %v1107 = vmax.f32 %v691, 0.0
    %v1108 = vmax.f32 %v692, 0.0
    %v1109 = vmax.f32 %v693, 0.0
    %v1110 = vmax.f32 %v694, 0.0
    %v1111 = vmax.f32 %v695, 0.0
    %v1112 = vmax.f32 %v696, 0.0
    %v1113 = vmax.f32 %v697, 0.0
    %v1114 = vmax.f32 %v698, 0.0
    %v1115 = vmax.f32 %v699, 0.0
    %v1116 = vmax.f32 %v700, 0.0
    %v1117 = vmax.f32 %v701, 0.0
    %v1118 = vmax.f32 %v702, 0.0
    %v1119 = vmax.f32 %v703, 0.0
    %v1120 = vmax.f32 %v704, 0.0
    %v1121 = vmax.f32 %v705, 0.0
    %v1122 = vmax.f32 %v706, 0.0
    %v1123 = vmax.f32 %v707, 0.0
    %v1124 = vmax.f32 %v708, 0.0
    %v1125 = vmax.f32 %v709, 0.0
    %v1126 = vmax.f32 %v710, 0.0
    %v1127 = vmax.f32 %v711, 0.0
    %v1128 = vmax.f32 %v712, 0.0
    %v1129 = vmax.f32 %v713, 0.0
    %v1130 = vmax.f32 %v714, 0.0
    %v1131 = vmax.f32 %v715, 0.0
    %v1132 = vmax.f32 %v716, 0.0
    %v1133 = vmax.f32 %v717, 0.0
    %v1134 = vmax.f32 %v718, 0.0
    %v1135 = vmax.f32 %v719, 0.0
    %v1136 = vmax.f32 %v720, 0.0
    %v1137 = vmax.f32 %v721, 0.0
    %v1138 = vmax.f32 %v722, 0.0
    %v1139 = vmax.f32 %v723, 0.0
    %v1140 = vmax.f32 %v724, 0.0
    %v1141 = vmax.f32 %v725, 0.0
    %v1142 = vmax.f32 %v726, 0.0
    %v1143 = vmax.f32 %v727, 0.0
    %v1144 = vmax.f32 %v728, 0.0
    %v1145 = vmax.f32 %v729, 0.0
    %v1146 = vmax.f32 %v730, 0.0
    %v1147 = vmax.f32 %v731, 0.0
    %v1148 = vmax.f32 %v732, 0.0
    %v1149 = vmax.f32 %v733, 0.0
    %v1150 = vmax.f32 %v734, 0.0
    %v1151 = vmax.f32 %v735, 0.0
    %v1152 = vmax.f32 %v736, 0.0
    %v1153 = vmax.f32 %v737, 0.0
    %v1154 = vmax.f32 %v738, 0.0
    %v1155 = vmax.f32 %v739, 0.0
    %v1156 = vmax.f32 %v740, 0.0
    %v1157 = vmax.f32 %v741, 0.0
    %v1158 = vmax.f32 %v742, 0.0
    %v1159 = vmax.f32 %v743, 0.0
    %v1160 = vmax.f32 %v744, 0.0
    %v1161 = vmax.f32 %v745, 0.0
    %v1162 = vmax.f32 %v746, 0.0
    %v1163 = vmax.f32 %v747, 0.0
    %v1164 = vmax.f32 %v748, 0.0
    %v1165 = vmax.f32 %v749, 0.0
    %v1166 = vmax.f32 %v750, 0.0
    %v1167 = vmax.f32 %v751, 0.0
    %v1168 = vmax.f32 %v752, 0.0
    %v1169 = vmax.f32 %v753, 0.0
    %v1170 = vmax.f32 %v754, 0.0
    %v1171 = vmax.f32 %v755, 0.0
    %v1172 = vmax.f32 %v756, 0.0
    %v1173 = vmax.f32 %v757, 0.0
    %v1174 = vmax.f32 %v758, 0.0
    %v1175 = vmax.f32 %v759, 0.0
    %v1176 = vmax.f32 %v760, 0.0
    %v1177 = vmax.f32 %v761, 0.0
    %v1178 = vmax.f32 %v762, 0.0
    %v1179 = vmax.f32 %v763, 0.0
    %v1180 = vmax.f32 %v764, 0.0
    %v1181 = vmax.f32 %v765, 0.0
    %v1182 = vmax.f32 %v766, 0.0
    %v1183 = vmax.f32 %v767, 0.0
    %v1184 = vmax.f32 %v768, 0.0
    %v1185 = vmax.f32 %v769, 0.0
    %v1186 = vmax.f32 %v770, 0.0
    %v1187 = vmax.f32 %v771, 0.0
    %v1188 = vmax.f32 %v772, 0.0
    %v1189 = vmax.f32 %v773, 0.0
    %v1190 = vmax.f32 %v774, 0.0
    %v1191 = vmax.f32 %v775, 0.0
    %v1192 = vmax.f32 %v776, 0.0
    %v1193 = vmax.f32 %v777, 0.0
    %v1194 = vmax.f32 %v778, 0.0
    %v1195 = vmax.f32 %v779, 0.0
    %v1196 = vmax.f32 %v780, 0.0
    %v1197 = vmax.f32 %v781, 0.0
    %v1198 = vmax.f32 %v782, 0.0
    %v1199 = vmax.f32 %v783, 0.0
    %v1200 = vmax.f32 %v784, 0.0
    %v1201 = vmax.f32 %v785, 0.0
    %v1202 = vmax.f32 %v786, 0.0
    %v1203 = vmax.f32 %v787, 0.0
    %v1204 = vmax.f32 %v788, 0.0
    %v1205 = vmax.f32 %v789, 0.0
    %v1206 = vmax.f32 %v790, 0.0
    %v1207 = vmax.f32 %v791, 0.0
    %v1208 = vmax.f32 %v792, 0.0
    %v1209 = vmax.f32 %v793, 0.0
    %v1210 = vmax.f32 %v794, 0.0
    %v1211 = vmax.f32 %v795, 0.0
    %v1212 = vmax.f32 %v796, 0.0
    %v1213 = vmax.f32 %v797, 0.0
    %v1214 = vmax.f32 %v798, 0.0
    %v1215 = vmax.f32 %v799, 0.0
    %v1216 = vmax.f32 %v800, 0.0
    %v1217 = vmax.f32 %v801, 0.0
    %v1218 = vmax.f32 %v802, 0.0
    %v1219 = vmax.f32 %v803, 0.0
    %v1220 = vmax.f32 %v804, 0.0
    %v1221 = vmax.f32 %v805, 0.0
    %v1222 = vmax.f32 %v806, 0.0
    %v1223 = vmax.f32 %v807, 0.0
    %v1224 = vmax.f32 %v808, 0.0
    %v1225 = vmax.f32 %v809, 0.0
    %v1226 = vmax.f32 %v810, 0.0
    %v1227 = vmax.f32 %v811, 0.0
    %v1228 = vmax.f32 %v812, 0.0
    %v1229 = vmax.f32 %v813, 0.0
    %v1230 = vmax.f32 %v814, 0.0
    %v1231 = vmax.f32 %v815, 0.0
    %v1232 = vmax.f32 %v816, 0.0
    %v1233 = vmax.f32 %v817, 0.0
    %v1234 = vmax.f32 %v818, 0.0
    %v1235 = vmax.f32 %v819, 0.0
    %v1236 = vmax.f32 %v820, 0.0
    %v1237 = vmax.f32 %v821, 0.0
    %v1238 = vmax.f32 %v822, 0.0
    %v1239 = vmax.f32 %v823, 0.0
    %v1240 = vmax.f32 %v824, 0.0
    %v1241 = vmax.f32 %v825, 0.0
    %v1242 = vmax.f32 %v826, 0.0
    %v1243 = vmax.f32 %v827, 0.0
    %v1244 = vmax.f32 %v828, 0.0
    %v1245 = vmax.f32 %v829, 0.0
    %v1246 = vmax.f32 %v830, 0.0
    %v1247 = vmax.f32 %v831, 0.0
    %v1248 = vmax.f32 %v832, 0.0
    %v1249 = vmax.f32 %v833, 0.0
    %v1250 = vmax.f32 %v834, 0.0
    %v1251 = vmax.f32 %v835, 0.0
    %v1252 = vmax.f32 %v836, 0.0
    %v1253 = vmax.f32 %v837, 0.0
    %v1254 = vmax.f32 %v838, 0.0
    %v1255 = vmax.f32 %v839, 0.0
    %v1256 = vmax.f32 %v840, 0.0
    %v1257 = vmax.f32 %v841, 0.0
    %v1258 = vmax.f32 %v842, 0.0
    %v1259 = vmax.f32 %v843, 0.0
    %v1260 = vmax.f32 %v844, 0.0
    %v1261 = vmax.f32 %v845, 0.0
    %v1262 = vmax.f32 %v846, 0.0
    %v1263 = vmax.f32 %v847, 0.0
    %v1264 = vmax.f32 %v848, 0.0
    %v1265 = vmax.f32 %v849, 0.0
    %v1266 = vmax.f32 %v850, 0.0
    %v1267 = vmax.f32 %v851, 0.0
    %v1268 = vmax.f32 %v852, 0.0
    %v1269 = vmax.f32 %v853, 0.0
    %v1270 = vmax.f32 %v854, 0.0
    %v1271 = vmin.f32 %v855, 6.0
    %v1272 = vmin.f32 %v856, 6.0
    %v1273 = vmin.f32 %v857, 6.0
    %v1274 = vmin.f32 %v858, 6.0
    %v1275 = vmin.f32 %v859, 6.0
    %v1276 = vmin.f32 %v860, 6.0
    %v1277 = vmin.f32 %v861, 6.0
    %v1278 = vmin.f32 %v862, 6.0
    %v1279 = vmin.f32 %v863, 6.0
    %v1280 = vmin.f32 %v864, 6.0
    %v1281 = vmin.f32 %v865, 6.0
    %v1282 = vmin.f32 %v866, 6.0
    %v1283 = vmin.f32 %v867, 6.0
    %v1284 = vmin.f32 %v868, 6.0
    %v1285 = vmin.f32 %v869, 6.0
    %v1286 = vmin.f32 %v870, 6.0
    %v1287 = vmin.f32 %v871, 6.0
    %v1288 = vmin.f32 %v872, 6.0
    %v1289 = vmin.f32 %v873, 6.0
    %v1290 = vmin.f32 %v874, 6.0
    %v1291 = vmin.f32 %v875, 6.0
    %v1292 = vmin.f32 %v876, 6.0
    %v1293 = vmin.f32 %v877, 6.0
    %v1294 = vmin.f32 %v878, 6.0
    %v1295 = vmin.f32 %v879, 6.0
    %v1296 = vmin.f32 %v880, 6.0
    %v1297 = vmin.f32 %v881, 6.0
    %v1298 = vmin.f32 %v882, 6.0
    %v1299 = vmin.f32 %v883, 6.0
    %v1300 = vmin.f32 %v884, 6.0
    %v1301 = vmin.f32 %v885, 6.0
    %v1302 = vmin.f32 %v886, 6.0
    %v1303 = vmin.f32 %v887, 6.0
    %v1304 = vmin.f32 %v888, 6.0
    %v1305 = vmin.f32 %v889, 6.0
    %v1306 = vmin.f32 %v890, 6.0
    %v1307 = vmin.f32 %v891, 6.0
    %v1308 = vmin.f32 %v892, 6.0
    %v1309 = vmin.f32 %v893, 6.0
    %v1310 = vmin.f32 %v894, 6.0
    %v1311 = vmin.f32 %v895, 6.0
    %v1312 = vmin.f32 %v896, 6.0
    %v1313 = vmin.f32 %v897, 6.0
    %v1314 = vmin.f32 %v898, 6.0
    %v1315 = vmin.f32 %v899, 6.0
    %v1316 = vmin.f32 %v900, 6.0
    %v1317 = vmin.f32 %v901, 6.0
    %v1318 = vmin.f32 %v902, 6.0
    %v1319 = vmin.f32 %v903, 6.0
    %v1320 = vmin.f32 %v904, 6.0
    %v1321 = vmin.f32 %v905, 6.0
    %v1322 = vmin.f32 %v906, 6.0
    %v1323 = vmin.f32 %v907, 6.0
    %v1324 = vmin.f32 %v908, 6.0
    %v1325 = vmin.f32 %v909, 6.0
    %v1326 = vmin.f32 %v910, 6.0
    %v1327 = vmin.f32 %v911, 6.0
    %v1328 = vmin.f32 %v912, 6.0
    %v1329 = vmin.f32 %v913, 6.0
    %v1330 = vmin.f32 %v914, 6.0
    %v1331 = vmin.f32 %v915, 6.0
    %v1332 = vmin.f32 %v916, 6.0
    %v1333 = vmin.f32 %v917, 6.0
    %v1334 = vmin.f32 %v918, 6.0
    %v1335 = vmin.f32 %v919, 6.0
    %v1336 = vmin.f32 %v920, 6.0
    %v1337 = vmin.f32 %v921, 6.0
    %v1338 = vmin.f32 %v922, 6.0
    %v1339 = vmin.f32 %v923, 6.0
    %v1340 = vmin.f32 %v924, 6.0
    %v1341 = vmin.f32 %v925, 6.0
    %v1342 = vmin.f32 %v926, 6.0
    %v1343 = vmin.f32 %v927, 6.0
    %v1344 = vmin.f32 %v928, 6.0
    %v1345 = vmin.f32 %v929, 6.0
    %v1346 = vmin.f32 %v930, 6.0
    %v1347 = vmin.f32 %v931, 6.0
    %v1348 = vmin.f32 %v932, 6.0
    %v1349 = vmin.f32 %v933, 6.0
    %v1350 = vmin.f32 %v934, 6.0
    %v1351 = vmin.f32 %v935, 6.0
    %v1352 = vmin.f32 %v936, 6.0
    %v1353 = vmin.f32 %v937, 6.0
    %v1354 = vmin.f32 %v938, 6.0
    %v1355 = vmin.f32 %v939, 6.0
    %v1356 = vmin.f32 %v940, 6.0
    %v1357 = vmin.f32 %v941, 6.0
    %v1358 = vmin.f32 %v942, 6.0
    %v1359 = vmin.f32 %v943, 6.0
    %v1360 = vmin.f32 %v944, 6.0
    %v1361 = vmin.f32 %v945, 6.0
    %v1362 = vmin.f32 %v946, 6.0
    %v1363 = vmin.f32 %v947, 6.0
    %v1364 = vmin.f32 %v948, 6.0
    %v1365 = vmin.f32 %v949, 6.0
    %v1366 = vmin.f32 %v950, 6.0
    %v1367 = vmin.f32 %v951, 6.0
    %v1368 = vmin.f32 %v952, 6.0
    %v1369 = vmin.f32 %v953, 6.0
    %v1370 = vmin.f32 %v954, 6.0
    %v1371 = vmin.f32 %v955, 6.0
    %v1372 = vmin.f32 %v956, 6.0
    %v1373 = vmin.f32 %v957, 6.0
    %v1374 = vmin.f32 %v958, 6.0
    %v1375 = vmin.f32 %v959, 6.0
    %v1376 = vmin.f32 %v960, 6.0
    %v1377 = vmin.f32 %v961, 6.0
    %v1378 = vmin.f32 %v962, 6.0
    %v1379 = vmin.f32 %v963, 6.0
    %v1380 = vmin.f32 %v964, 6.0
    %v1381 = vmin.f32 %v965, 6.0
    %v1382 = vmin.f32 %v966, 6.0
    %v1383 = vmin.f32 %v967, 6.0
    %v1384 = vmin.f32 %v968, 6.0
    %v1385 = vmin.f32 %v969, 6.0
    %v1386 = vmin.f32 %v970, 6.0
    %v1387 = vmin.f32 %v971, 6.0
    %v1388 = vmin.f32 %v972, 6.0
    %v1389 = vmin.f32 %v973, 6.0
    %v1390 = vmin.f32 %v974, 6.0
    %v1391 = vmin.f32 %v975, 6.0
    %v1392 = vmin.f32 %v976, 6.0
    %v1393 = vmin.f32 %v977, 6.0
    %v1394 = vmin.f32 %v978, 6.0
    %v1395 = vmin.f32 %v979, 6.0
    %v1396 = vmin.f32 %v980, 6.0
    %v1397 = vmin.f32 %v981, 6.0
    %v1398 = vmin.f32 %v982, 6.0
    %v1399 = vmin.f32 %v983, 6.0
    %v1400 = vmin.f32 %v984, 6.0
    %v1401 = vmin.f32 %v985, 6.0
    %v1402 = vmin.f32 %v986, 6.0
    %v1403 = vmin.f32 %v987, 6.0
    %v1404 = vmin.f32 %v988, 6.0
    %v1405 = vmin.f32 %v989, 6.0
    %v1406 = vmin.f32 %v990, 6.0
    %v1407 = vmin.f32 %v991, 6.0
    %v1408 = vmin.f32 %v992, 6.0
    %v1409 = vmin.f32 %v993, 6.0
    %v1410 = vmin.f32 %v994, 6.0
    %v1411 = vmin.f32 %v995, 6.0
    %v1412 = vmin.f32 %v996, 6.0
    %v1413 = vmin.f32 %v997, 6.0
    %v1414 = vmin.f32 %v998, 6.0
    %v1415 = vmin.f32 %v999, 6.0
    %v1416 = vmin.f32 %v1000, 6.0
    %v1417 = vmin.f32 %v1001, 6.0
    %v1418 = vmin.f32 %v1002, 6.0
    %v1419 = vmin.f32 %v1003, 6.0
    %v1420 = vmin.f32 %v1004, 6.0
    %v1421 = vmin.f32 %v1005, 6.0
    %v1422 = vmin.f32 %v1006, 6.0
    %v1423 = vmin.f32 %v1007, 6.0
    %v1424 = vmin.f32 %v1008, 6.0
    %v1425 = vmin.f32 %v1009, 6.0
    %v1426 = vmin.f32 %v1010, 6.0
    %v1427 = vmin.f32 %v1011, 6.0
    %v1428 = vmin.f32 %v1012, 6.0
    %v1429 = vmin.f32 %v1013, 6.0
    %v1430 = vmin.f32 %v1014, 6.0
    %v1431 = vmin.f32 %v1015, 6.0
    %v1432 = vmin.f32 %v1016, 6.0
    %v1433 = vmin.f32 %v1017, 6.0
    %v1434 = vmin.f32 %v1018, 6.0
    %v1435 = vmin.f32 %v1019, 6.0
    %v1436 = vmin.f32 %v1020, 6.0
    %v1437 = vmin.f32 %v1021, 6.0
    %v1438 = vmin.f32 %v1022, 6.0
    %v1439 = vmin.f32 %v1023, 6.0
    %v1440 = vmin.f32 %v1024, 6.0
    %v1441 = vmin.f32 %v1025, 6.0
    %v1442 = vmin.f32 %v1026, 6.0
    %v1443 = vmin.f32 %v1027, 6.0
    %v1444 = vmin.f32 %v1028, 6.0
    %v1445 = vmin.f32 %v1029, 6.0
    %v1446 = vmin.f32 %v1030, 6.0
    %v1447 = vmin.f32 %v1031, 6.0
    %v1448 = vmin.f32 %v1032, 6.0
    %v1449 = vmin.f32 %v1033, 6.0
    %v1450 = vmin.f32 %v1034, 6.0
    %v1451 = vmin.f32 %v1035, 6.0
    %v1452 = vmin.f32 %v1036, 6.0
    %v1453 = vmin.f32 %v1037, 6.0
    %v1454 = vmin.f32 %v1038, 6.0
    %v1455 = vmin.f32 %v1039, 6.0
    %v1456 = vmin.f32 %v1040, 6.0
    %v1457 = vmin.f32 %v1041, 6.0
    %v1458 = vmin.f32 %v1042, 6.0
    %v1459 = vmin.f32 %v1043, 6.0
    %v1460 = vmin.f32 %v1044, 6.0
    %v1461 = vmin.f32 %v1045, 6.0
    %v1462 = vmin.f32 %v1046, 6.0
    %v1463 = vmin.f32 %v1047, 6.0
    %v1464 = vmin.f32 %v1048, 6.0
    %v1465 = vmin.f32 %v1049, 6.0
    %v1466 = vmin.f32 %v1050, 6.0
    %v1467 = vmin.f32 %v1051, 6.0
    %v1468 = vmin.f32 %v1052, 6.0
    %v1469 = vmin.f32 %v1053, 6.0
    %v1470 = vmin.f32 %v1054, 6.0
    %v1471 = vmin.f32 %v1055, 6.0
    %v1472 = vmin.f32 %v1056, 6.0
    %v1473 = vmin.f32 %v1057, 6.0
    %v1474 = vmin.f32 %v1058, 6.0
    %v1475 = vmin.f32 %v1059, 6.0
    %v1476 = vmin.f32 %v1060, 6.0
    %v1477 = vmin.f32 %v1061, 6.0
    %v1478 = vmin.f32 %v1062, 6.0
    %v1479 = vmin.f32 %v1063, 6.0
    %v1480 = vmin.f32 %v1064, 6.0
    %v1481 = vmin.f32 %v1065, 6.0
    %v1482 = vmin.f32 %v1066, 6.0
    %v1483 = vmin.f32 %v1067, 6.0
    %v1484 = vmin.f32 %v1068, 6.0
    %v1485 = vmin.f32 %v1069, 6.0
    %v1486 = vmin.f32 %v1070, 6.0
    %v1487 = vmin.f32 %v1071, 6.0
    %v1488 = vmin.f32 %v1072, 6.0
    %v1489 = vmin.f32 %v1073, 6.0
    %v1490 = vmin.f32 %v1074, 6.0
    %v1491 = vmin.f32 %v1075, 6.0
    %v1492 = vmin.f32 %v1076, 6.0
    %v1493 = vmin.f32 %v1077, 6.0
    %v1494 = vmin.f32 %v1078, 6.0
    %v1495 = vmin.f32 %v1079, 6.0
    %v1496 = vmin.f32 %v1080, 6.0
    %v1497 = vmin.f32 %v1081, 6.0
    %v1498 = vmin.f32 %v1082, 6.0
    %v1499 = vmin.f32 %v1083, 6.0
    %v1500 = vmin.f32 %v1084, 6.0
    %v1501 = vmin.f32 %v1085, 6.0
    %v1502 = vmin.f32 %v1086, 6.0
    %v1503 = vmin.f32 %v1087, 6.0
    %v1504 = vmin.f32 %v1088, 6.0
    %v1505 = vmin.f32 %v1089, 6.0
    %v1506 = vmin.f32 %v1090, 6.0
    %v1507 = vmin.f32 %v1091, 6.0
    %v1508 = vmin.f32 %v1092, 6.0
    %v1509 = vmin.f32 %v1093, 6.0
    %v1510 = vmin.f32 %v1094, 6.0
    %v1511 = vmin.f32 %v1095, 6.0
    %v1512 = vmin.f32 %v1096, 6.0
    %v1513 = vmin.f32 %v1097, 6.0
    %v1514 = vmin.f32 %v1098, 6.0
    %v1515 = vmin.f32 %v1099, 6.0
    %v1516 = vmin.f32 %v1100, 6.0
    %v1517 = vmin.f32 %v1101, 6.0
    %v1518 = vmin.f32 %v1102, 6.0
    %v1519 = vmin.f32 %v1103, 6.0
    %v1520 = vmin.f32 %v1104, 6.0
    %v1521 = vmin.f32 %v1105, 6.0
    %v1522 = vmin.f32 %v1106, 6.0
    %v1523 = vmin.f32 %v1107, 6.0
    %v1524 = vmin.f32 %v1108, 6.0
    %v1525 = vmin.f32 %v1109, 6.0
    %v1526 = vmin.f32 %v1110, 6.0
    %v1527 = vmin.f32 %v1111, 6.0
    %v1528 = vmin.f32 %v1112, 6.0
    %v1529 = vmin.f32 %v1113, 6.0
    %v1530 = vmin.f32 %v1114, 6.0
    %v1531 = vmin.f32 %v1115, 6.0
    %v1532 = vmin.f32 %v1116, 6.0
    %v1533 = vmin.f32 %v1117, 6.0
    %v1534 = vmin.f32 %v1118, 6.0
    %v1535 = vmin.f32 %v1119, 6.0
    %v1536 = vmin.f32 %v1120, 6.0
    %v1537 = vmin.f32 %v1121, 6.0
    %v1538 = vmin.f32 %v1122, 6.0
    %v1539 = vmin.f32 %v1123, 6.0
    %v1540 = vmin.f32 %v1124, 6.0
    %v1541 = vmin.f32 %v1125, 6.0
    %v1542 = vmin.f32 %v1126, 6.0
    %v1543 = vmin.f32 %v1127, 6.0
    %v1544 = vmin.f32 %v1128, 6.0
    %v1545 = vmin.f32 %v1129, 6.0
    %v1546 = vmin.f32 %v1130, 6.0
    %v1547 = vmin.f32 %v1131, 6.0
    %v1548 = vmin.f32 %v1132, 6.0
    %v1549 = vmin.f32 %v1133, 6.0
    %v1550 = vmin.f32 %v1134, 6.0
    %v1551 = vmin.f32 %v1135, 6.0
    %v1552 = vmin.f32 %v1136, 6.0
    %v1553 = vmin.f32 %v1137, 6.0
    %v1554 = vmin.f32 %v1138, 6.0
    %v1555 = vmin.f32 %v1139, 6.0
    %v1556 = vmin.f32 %v1140, 6.0
    %v1557 = vmin.f32 %v1141, 6.0
    %v1558 = vmin.f32 %v1142, 6.0
    %v1559 = vmin.f32 %v1143, 6.0
    %v1560 = vmin.f32 %v1144, 6.0
    %v1561 = vmin.f32 %v1145, 6.0
    %v1562 = vmin.f32 %v1146, 6.0
    %v1563 = vmin.f32 %v1147, 6.0
    %v1564 = vmin.f32 %v1148, 6.0
    %v1565 = vmin.f32 %v1149, 6.0
    %v1566 = vmin.f32 %v1150, 6.0
    %v1567 = vmin.f32 %v1151, 6.0
    %v1568 = vmin.f32 %v1152, 6.0
    %v1569 = vmin.f32 %v1153, 6.0
    %v1570 = vmin.f32 %v1154, 6.0
    %v1571 = vmin.f32 %v1155, 6.0
    %v1572 = vmin.f32 %v1156, 6.0
    %v1573 = vmin.f32 %v1157, 6.0
    %v1574 = vmin.f32 %v1158, 6.0
    %v1575 = vmin.f32 %v1159, 6.0
    %v1576 = vmin.f32 %v1160, 6.0
    %v1577 = vmin.f32 %v1161, 6.0
    %v1578 = vmin.f32 %v1162, 6.0
    %v1579 = vmin.f32 %v1163, 6.0
    %v1580 = vmin.f32 %v1164, 6.0
    %v1581 = vmin.f32 %v1165, 6.0
    %v1582 = vmin.f32 %v1166, 6.0
    %v1583 = vmin.f32 %v1167, 6.0
    %v1584 = vmin.f32 %v1168, 6.0
    %v1585 = vmin.f32 %v1169, 6.0
    %v1586 = vmin.f32 %v1170, 6.0
    %v1587 = vmin.f32 %v1171, 6.0
    %v1588 = vmin.f32 %v1172, 6.0
    %v1589 = vmin.f32 %v1173, 6.0
    %v1590 = vmin.f32 %v1174, 6.0
    %v1591 = vmin.f32 %v1175, 6.0
    %v1592 = vmin.f32 %v1176, 6.0
    %v1593 = vmin.f32 %v1177, 6.0
    %v1594 = vmin.f32 %v1178, 6.0
    %v1595 = vmin.f32 %v1179, 6.0
    %v1596 = vmin.f32 %v1180, 6.0
    %v1597 = vmin.f32 %v1181, 6.0
    %v1598 = vmin.f32 %v1182, 6.0
    %v1599 = vmin.f32 %v1183, 6.0
    %v1600 = vmin.f32 %v1184, 6.0
    %v1601 = vmin.f32 %v1185, 6.0
    %v1602 = vmin.f32 %v1186, 6.0
    %v1603 = vmin.f32 %v1187, 6.0
    %v1604 = vmin.f32 %v1188, 6.0
    %v1605 = vmin.f32 %v1189, 6.0
    %v1606 = vmin.f32 %v1190, 6.0
    %v1607 = vmin.f32 %v1191, 6.0
    %v1608 = vmin.f32 %v1192, 6.0
    %v1609 = vmin.f32 %v1193, 6.0
    %v1610 = vmin.f32 %v1194, 6.0
    %v1611 = vmin.f32 %v1195, 6.0
    %v1612 = vmin.f32 %v1196, 6.0
    %v1613 = vmin.f32 %v1197, 6.0
    %v1614 = vmin.f32 %v1198, 6.0
    %v1615 = vmin.f32 %v1199, 6.0
    %v1616 = vmin.f32 %v1200, 6.0
    %v1617 = vmin.f32 %v1201, 6.0
    %v1618 = vmin.f32 %v1202, 6.0
    %v1619 = vmin.f32 %v1203, 6.0
    %v1620 = vmin.f32 %v1204, 6.0
    %v1621 = vmin.f32 %v1205, 6.0
    %v1622 = vmin.f32 %v1206, 6.0
    %v1623 = vmin.f32 %v1207, 6.0
    %v1624 = vmin.f32 %v1208, 6.0
    %v1625 = vmin.f32 %v1209, 6.0
    %v1626 = vmin.f32 %v1210, 6.0
    %v1627 = vmin.f32 %v1211, 6.0
    %v1628 = vmin.f32 %v1212, 6.0
    %v1629 = vmin.f32 %v1213, 6.0
    %v1630 = vmin.f32 %v1214, 6.0
    %v1631 = vmin.f32 %v1215, 6.0
    %v1632 = vmin.f32 %v1216, 6.0
    %v1633 = vmin.f32 %v1217, 6.0
    %v1634 = vmin.f32 %v1218, 6.0
    %v1635 = vmin.f32 %v1219, 6.0
    %v1636 = vmin.f32 %v1220, 6.0
    %v1637 = vmin.f32 %v1221, 6.0
    %v1638 = vmin.f32 %v1222, 6.0
    %v1639 = vmin.f32 %v1223, 6.0
    %v1640 = vmin.f32 %v1224, 6.0
    %v1641 = vmin.f32 %v1225, 6.0
    %v1642 = vmin.f32 %v1226, 6.0
    %v1643 = vmin.f32 %v1227, 6.0
    %v1644 = vmin.f32 %v1228, 6.0
    %v1645 = vmin.f32 %v1229, 6.0
    %v1646 = vmin.f32 %v1230, 6.0
    %v1647 = vmin.f32 %v1231, 6.0
    %v1648 = vmin.f32 %v1232, 6.0
    %v1649 = vmin.f32 %v1233, 6.0
    %v1650 = vmin.f32 %v1234, 6.0
    %v1651 = vmin.f32 %v1235, 6.0
    %v1652 = vmin.f32 %v1236, 6.0
    %v1653 = vmin.f32 %v1237, 6.0
    %v1654 = vmin.f32 %v1238, 6.0
    %v1655 = vmin.f32 %v1239, 6.0
    %v1656 = vmin.f32 %v1240, 6.0
    %v1657 = vmin.f32 %v1241, 6.0
    %v1658 = vmin.f32 %v1242, 6.0
    %v1659 = vmin.f32 %v1243, 6.0
    %v1660 = vmin.f32 %v1244, 6.0
    %v1661 = vmin.f32 %v1245, 6.0
    %v1662 = vmin.f32 %v1246, 6.0
    %v1663 = vmin.f32 %v1247, 6.0
    %v1664 = vmin.f32 %v1248, 6.0
    %v1665 = vmin.f32 %v1249, 6.0
    %v1666 = vmin.f32 %v1250, 6.0
    %v1667 = vmin.f32 %v1251, 6.0
    %v1668 = vmin.f32 %v1252, 6.0
    %v1669 = vmin.f32 %v1253, 6.0
    %v1670 = vmin.f32 %v1254, 6.0
    %v1671 = vmin.f32 %v1255, 6.0
    %v1672 = vmin.f32 %v1256, 6.0
    %v1673 = vmin.f32 %v1257, 6.0
    %v1674 = vmin.f32 %v1258, 6.0
    %v1675 = vmin.f32 %v1259, 6.0
    %v1676 = vmin.f32 %v1260, 6.0
    %v1677 = vmin.f32 %v1261, 6.0
    %v1678 = vmin.f32 %v1262, 6.0
    %v1679 = vmin.f32 %v1263, 6.0
    %v1680 = vmin.f32 %v1264, 6.0
    %v1681 = vmin.f32 %v1265, 6.0
    %v1682 = vmin.f32 %v1266, 6.0
    %v1683 = vmin.f32 %v1267, 6.0
    %v1684 = vmin.f32 %v1268, 6.0
    %v1685 = vmin.f32 %v1269, 6.0
    %v1686 = vmin.f32 %v1270, 6.0
    %v1687 = vmul.f32 %v1271, 0.16666667
    %v1688 = vmul.f32 %v1272, 0.16666667
    %v1689 = vmul.f32 %v1273, 0.16666667
    %v1690 = vmul.f32 %v1274, 0.16666667
    %v1691 = vmul.f32 %v1275, 0.16666667
    %v1692 = vmul.f32 %v1276, 0.16666667
    %v1693 = vmul.f32 %v1277, 0.16666667
    %v1694 = vmul.f32 %v1278, 0.16666667
    %v1695 = vmul.f32 %v1279, 0.16666667
    %v1696 = vmul.f32 %v1280, 0.16666667
    %v1697 = vmul.f32 %v1281, 0.16666667
    %v1698 = vmul.f32 %v1282, 0.16666667
    %v1699 = vmul.f32 %v1283, 0.16666667
    %v1700 = vmul.f32 %v1284, 0.16666667
    %v1701 = vmul.f32 %v1285, 0.16666667
    %v1702 = vmul.f32 %v1286, 0.16666667
    %v1703 = vmul.f32 %v1287, 0.16666667
    %v1704 = vmul.f32 %v1288, 0.16666667
    %v1705 = vmul.f32 %v1289, 0.16666667
    %v1706 = vmul.f32 %v1290, 0.16666667
    %v1707 = vmul.f32 %v1291, 0.16666667
    %v1708 = vmul.f32 %v1292, 0.16666667
    %v1709 = vmul.f32 %v1293, 0.16666667
    %v1710 = vmul.f32 %v1294, 0.16666667
    %v1711 = vmul.f32 %v1295, 0.16666667
    %v1712 = vmul.f32 %v1296, 0.16666667
    %v1713 = vmul.f32 %v1297, 0.16666667
    %v1714 = vmul.f32 %v1298, 0.16666667
    %v1715 = vmul.f32 %v1299, 0.16666667
    %v1716 = vmul.f32 %v1300, 0.16666667
    %v1717 = vmul.f32 %v1301, 0.16666667
    %v1718 = vmul.f32 %v1302, 0.16666667
    %v1719 = vmul.f32 %v1303, 0.16666667
    %v1720 = vmul.f32 %v1304, 0.16666667
    %v1721 = vmul.f32 %v1305, 0.16666667
    %v1722 = vmul.f32 %v1306, 0.16666667
    %v1723 = vmul.f32 %v1307, 0.16666667
    %v1724 = vmul.f32 %v1308, 0.16666667
    %v1725 = vmul.f32 %v1309, 0.16666667
    %v1726 = vmul.f32 %v1310, 0.16666667
    %v1727 = vmul.f32 %v1311, 0.16666667
    %v1728 = vmul.f32 %v1312, 0.16666667
    %v1729 = vmul.f32 %v1313, 0.16666667
    %v1730 = vmul.f32 %v1314, 0.16666667
    %v1731 = vmul.f32 %v1315, 0.16666667
    %v1732 = vmul.f32 %v1316, 0.16666667
    %v1733 = vmul.f32 %v1317, 0.16666667
    %v1734 = vmul.f32 %v1318, 0.16666667
    %v1735 = vmul.f32 %v1319, 0.16666667
    %v1736 = vmul.f32 %v1320, 0.16666667
    %v1737 = vmul.f32 %v1321, 0.16666667
    %v1738 = vmul.f32 %v1322, 0.16666667
    %v1739 = vmul.f32 %v1323, 0.16666667
    %v1740 = vmul.f32 %v1324, 0.16666667
    %v1741 = vmul.f32 %v1325, 0.16666667
    %v1742 = vmul.f32 %v1326, 0.16666667
    %v1743 = vmul.f32 %v1327, 0.16666667
    %v1744 = vmul.f32 %v1328, 0.16666667
    %v1745 = vmul.f32 %v1329, 0.16666667
    %v1746 = vmul.f32 %v1330, 0.16666667
    %v1747 = vmul.f32 %v1331, 0.16666667
    %v1748 = vmul.f32 %v1332, 0.16666667
    %v1749 = vmul.f32 %v1333, 0.16666667
    %v1750 = vmul.f32 %v1334, 0.16666667
    %v1751 = vmul.f32 %v1335, 0.16666667
    %v1752 = vmul.f32 %v1336, 0.16666667
    %v1753 = vmul.f32 %v1337, 0.16666667
    %v1754 = vmul.f32 %v1338, 0.16666667
    %v1755 = vmul.f32 %v1339, 0.16666667
    %v1756 = vmul.f32 %v1340, 0.16666667
    %v1757 = vmul.f32 %v1341, 0.16666667
    %v1758 = vmul.f32 %v1342, 0.16666667
    %v1759 = vmul.f32 %v1343, 0.16666667
    %v1760 = vmul.f32 %v1344, 0.16666667
    %v1761 = vmul.f32 %v1345, 0.16666667
    %v1762 = vmul.f32 %v1346, 0.16666667
    %v1763 = vmul.f32 %v1347, 0.16666667
    %v1764 = vmul.f32 %v1348, 0.16666667
    %v1765 = vmul.f32 %v1349, 0.16666667
    %v1766 = vmul.f32 %v1350, 0.16666667
    %v1767 = vmul.f32 %v1351, 0.16666667
    %v1768 = vmul.f32 %v1352, 0.16666667
    %v1769 = vmul.f32 %v1353, 0.16666667
    %v1770 = vmul.f32 %v1354, 0.16666667
    %v1771 = vmul.f32 %v1355, 0.16666667
    %v1772 = vmul.f32 %v1356, 0.16666667
    %v1773 = vmul.f32 %v1357, 0.16666667
    %v1774 = vmul.f32 %v1358, 0.16666667
    %v1775 = vmul.f32 %v1359, 0.16666667
    %v1776 = vmul.f32 %v1360, 0.16666667
    %v1777 = vmul.f32 %v1361, 0.16666667
    %v1778 = vmul.f32 %v1362, 0.16666667
    %v1779 = vmul.f32 %v1363, 0.16666667
    %v1780 = vmul.f32 %v1364, 0.16666667
    %v1781 = vmul.f32 %v1365, 0.16666667
    %v1782 = vmul.f32 %v1366, 0.16666667
    %v1783 = vmul.f32 %v1367, 0.16666667
    %v1784 = vmul.f32 %v1368, 0.16666667
    %v1785 = vmul.f32 %v1369, 0.16666667
    %v1786 = vmul.f32 %v1370, 0.16666667
    %v1787 = vmul.f32 %v1371, 0.16666667
    %v1788 = vmul.f32 %v1372, 0.16666667
    %v1789 = vmul.f32 %v1373, 0.16666667
    %v1790 = vmul.f32 %v1374, 0.16666667
    %v1791 = vmul.f32 %v1375, 0.16666667
    %v1792 = vmul.f32 %v1376, 0.16666667
    %v1793 = vmul.f32 %v1377, 0.16666667
    %v1794 = vmul.f32 %v1378, 0.16666667
    %v1795 = vmul.f32 %v1379, 0.16666667
    %v1796 = vmul.f32 %v1380, 0.16666667
    %v1797 = vmul.f32 %v1381, 0.16666667
    %v1798 = vmul.f32 %v1382, 0.16666667
    %v1799 = vmul.f32 %v1383, 0.16666667
    %v1800 = vmul.f32 %v1384, 0.16666667
    %v1801 = vmul.f32 %v1385, 0.16666667
    %v1802 = vmul.f32 %v1386, 0.16666667
    %v1803 = vmul.f32 %v1387, 0.16666667
    %v1804 = vmul.f32 %v1388, 0.16666667
    %v1805 = vmul.f32 %v1389, 0.16666667
    %v1806 = vmul.f32 %v1390, 0.16666667
    %v1807 = vmul.f32 %v1391, 0.16666667
    %v1808 = vmul.f32 %v1392, 0.16666667
    %v1809 = vmul.f32 %v1393, 0.16666667
    %v1810 = vmul.f32 %v1394, 0.16666667
    %v1811 = vmul.f32 %v1395, 0.16666667
    %v1812 = vmul.f32 %v1396, 0.16666667
    %v1813 = vmul.f32 %v1397, 0.16666667
    %v1814 = vmul.f32 %v1398, 0.16666667
    %v1815 = vmul.f32 %v1399, 0.16666667
    %v1816 = vmul.f32 %v1400, 0.16666667
    %v1817 = vmul.f32 %v1401, 0.16666667
    %v1818 = vmul.f32 %v1402, 0.16666667
    %v1819 = vmul.f32 %v1403, 0.16666667
    %v1820 = vmul.f32 %v1404, 0.16666667
    %v1821 = vmul.f32 %v1405, 0.16666667
    %v1822 = vmul.f32 %v1406, 0.16666667
    %v1823 = vmul.f32 %v1407, 0.16666667
    %v1824 = vmul.f32 %v1408, 0.16666667
    %v1825 = vmul.f32 %v1409, 0.16666667
    %v1826 = vmul.f32 %v1410, 0.16666667
    %v1827 = vmul.f32 %v1411, 0.16666667
    %v1828 = vmul.f32 %v1412, 0.16666667
    %v1829 = vmul.f32 %v1413, 0.16666667
    %v1830 = vmul.f32 %v1414, 0.16666667
    %v1831 = vmul.f32 %v1415, 0.16666667
    %v1832 = vmul.f32 %v1416, 0.16666667
    %v1833 = vmul.f32 %v1417, 0.16666667
    %v1834 = vmul.f32 %v1418, 0.16666667
    %v1835 = vmul.f32 %v1419, 0.16666667
    %v1836 = vmul.f32 %v1420, 0.16666667
    %v1837 = vmul.f32 %v1421, 0.16666667
    %v1838 = vmul.f32 %v1422, 0.16666667
    %v1839 = vmul.f32 %v1423, 0.16666667
    %v1840 = vmul.f32 %v1424, 0.16666667
    %v1841 = vmul.f32 %v1425, 0.16666667
    %v1842 = vmul.f32 %v1426, 0.16666667
    %v1843 = vmul.f32 %v1427, 0.16666667
    %v1844 = vmul.f32 %v1428, 0.16666667
    %v1845 = vmul.f32 %v1429, 0.16666667
    %v1846 = vmul.f32 %v1430, 0.16666667
    %v1847 = vmul.f32 %v1431, 0.16666667
    %v1848 = vmul.f32 %v1432, 0.16666667
    %v1849 = vmul.f32 %v1433, 0.16666667
    %v1850 = vmul.f32 %v1434, 0.16666667
    %v1851 = vmul.f32 %v1435, 0.16666667
    %v1852 = vmul.f32 %v1436, 0.16666667
    %v1853 = vmul.f32 %v1437, 0.16666667
    %v1854 = vmul.f32 %v1438, 0.16666667
    %v1855 = vmul.f32 %v1439, 0.16666667
    %v1856 = vmul.f32 %v1440, 0.16666667
    %v1857 = vmul.f32 %v1441, 0.16666667
    %v1858 = vmul.f32 %v1442, 0.16666667
    %v1859 = vmul.f32 %v1443, 0.16666667
    %v1860 = vmul.f32 %v1444, 0.16666667
    %v1861 = vmul.f32 %v1445, 0.16666667
    %v1862 = vmul.f32 %v1446, 0.16666667
    %v1863 = vmul.f32 %v1447, 0.16666667
    %v1864 = vmul.f32 %v1448, 0.16666667
    %v1865 = vmul.f32 %v1449, 0.16666667
    %v1866 = vmul.f32 %v1450, 0.16666667
    %v1867 = vmul.f32 %v1451, 0.16666667
    %v1868 = vmul.f32 %v1452, 0.16666667
    %v1869 = vmul.f32 %v1453, 0.16666667
    %v1870 = vmul.f32 %v1454, 0.16666667
    %v1871 = vmul.f32 %v1455, 0.16666667
    %v1872 = vmul.f32 %v1456, 0.16666667
    %v1873 = vmul.f32 %v1457, 0.16666667
    %v1874 = vmul.f32 %v1458, 0.16666667
    %v1875 = vmul.f32 %v1459, 0.16666667
    %v1876 = vmul.f32 %v1460, 0.16666667
    %v1877 = vmul.f32 %v1461, 0.16666667
    %v1878 = vmul.f32 %v1462, 0.16666667
    %v1879 = vmul.f32 %v1463, 0.16666667
    %v1880 = vmul.f32 %v1464, 0.16666667
    %v1881 = vmul.f32 %v1465, 0.16666667
    %v1882 = vmul.f32 %v1466, 0.16666667
    %v1883 = vmul.f32 %v1467, 0.16666667
    %v1884 = vmul.f32 %v1468, 0.16666667
    %v1885 = vmul.f32 %v1469, 0.16666667
    %v1886 = vmul.f32 %v1470, 0.16666667
    %v1887 = vmul.f32 %v1471, 0.16666667
    %v1888 = vmul.f32 %v1472, 0.16666667
    %v1889 = vmul.f32 %v1473, 0.16666667
    %v1890 = vmul.f32 %v1474, 0.16666667
    %v1891 = vmul.f32 %v1475, 0.16666667
    %v1892 = vmul.f32 %v1476, 0.16666667
    %v1893 = vmul.f32 %v1477, 0.16666667
    %v1894 = vmul.f32 %v1478, 0.16666667
    %v1895 = vmul.f32 %v1479, 0.16666667
    %v1896 = vmul.f32 %v1480, 0.16666667
    %v1897 = vmul.f32 %v1481, 0.16666667
    %v1898 = vmul.f32 %v1482, 0.16666667
    %v1899 = vmul.f32 %v1483, 0.16666667
    %v1900 = vmul.f32 %v1484, 0.16666667
    %v1901 = vmul.f32 %v1485, 0.16666667
    %v1902 = vmul.f32 %v1486, 0.16666667
    %v1903 = vmul.f32 %v1487, 0.16666667
    %v1904 = vmul.f32 %v1488, 0.16666667
    %v1905 = vmul.f32 %v1489, 0.16666667
    %v1906 = vmul.f32 %v1490, 0.16666667
    %v1907 = vmul.f32 %v1491, 0.16666667
    %v1908 = vmul.f32 %v1492, 0.16666667
    %v1909 = vmul.f32 %v1493, 0.16666667
    %v1910 = vmul.f32 %v1494, 0.16666667
    %v1911 = vmul.f32 %v1495, 0.16666667
    %v1912 = vmul.f32 %v1496, 0.16666667
    %v1913 = vmul.f32 %v1497, 0.16666667
    %v1914 = vmul.f32 %v1498, 0.16666667
    %v1915 = vmul.f32 %v1499, 0.16666667
    %v1916 = vmul.f32 %v1500, 0.16666667
    %v1917 = vmul.f32 %v1501, 0.16666667
    %v1918 = vmul.f32 %v1502, 0.16666667
    %v1919 = vmul.f32 %v1503, 0.16666667
    %v1920 = vmul.f32 %v1504, 0.16666667
    %v1921 = vmul.f32 %v1505, 0.16666667
    %v1922 = vmul.f32 %v1506, 0.16666667
    %v1923 = vmul.f32 %v1507, 0.16666667
    %v1924 = vmul.f32 %v1508, 0.16666667
    %v1925 = vmul.f32 %v1509, 0.16666667
    %v1926 = vmul.f32 %v1510, 0.16666667
    %v1927 = vmul.f32 %v1511, 0.16666667
    %v1928 = vmul.f32 %v1512, 0.16666667
    %v1929 = vmul.f32 %v1513, 0.16666667
    %v1930 = vmul.f32 %v1514, 0.16666667
    %v1931 = vmul.f32 %v1515, 0.16666667
    %v1932 = vmul.f32 %v1516, 0.16666667
    %v1933 = vmul.f32 %v1517, 0.16666667
    %v1934 = vmul.f32 %v1518, 0.16666667
    %v1935 = vmul.f32 %v1519, 0.16666667
    %v1936 = vmul.f32 %v1520, 0.16666667
    %v1937 = vmul.f32 %v1521, 0.16666667
    %v1938 = vmul.f32 %v1522, 0.16666667
    %v1939 = vmul.f32 %v1523, 0.16666667
    %v1940 = vmul.f32 %v1524, 0.16666667
    %v1941 = vmul.f32 %v1525, 0.16666667
    %v1942 = vmul.f32 %v1526, 0.16666667
    %v1943 = vmul.f32 %v1527, 0.16666667
    %v1944 = vmul.f32 %v1528, 0.16666667
    %v1945 = vmul.f32 %v1529, 0.16666667
    %v1946 = vmul.f32 %v1530, 0.16666667
    %v1947 = vmul.f32 %v1531, 0.16666667
    %v1948 = vmul.f32 %v1532, 0.16666667
    %v1949 = vmul.f32 %v1533, 0.16666667
    %v1950 = vmul.f32 %v1534, 0.16666667
    %v1951 = vmul.f32 %v1535, 0.16666667
    %v1952 = vmul.f32 %v1536, 0.16666667
    %v1953 = vmul.f32 %v1537, 0.16666667
    %v1954 = vmul.f32 %v1538, 0.16666667
    %v1955 = vmul.f32 %v1539, 0.16666667
    %v1956 = vmul.f32 %v1540, 0.16666667
    %v1957 = vmul.f32 %v1541, 0.16666667
    %v1958 = vmul.f32 %v1542, 0.16666667
    %v1959 = vmul.f32 %v1543, 0.16666667
    %v1960 = vmul.f32 %v1544, 0.16666667
    %v1961 = vmul.f32 %v1545, 0.16666667
    %v1962 = vmul.f32 %v1546, 0.16666667
    %v1963 = vmul.f32 %v1547, 0.16666667
    %v1964 = vmul.f32 %v1548, 0.16666667
    %v1965 = vmul.f32 %v1549, 0.16666667
    %v1966 = vmul.f32 %v1550, 0.16666667
    %v1967 = vmul.f32 %v1551, 0.16666667
    %v1968 = vmul.f32 %v1552, 0.16666667
    %v1969 = vmul.f32 %v1553, 0.16666667
    %v1970 = vmul.f32 %v1554, 0.16666667
    %v1971 = vmul.f32 %v1555, 0.16666667
    %v1972 = vmul.f32 %v1556, 0.16666667
    %v1973 = vmul.f32 %v1557, 0.16666667
    %v1974 = vmul.f32 %v1558, 0.16666667
    %v1975 = vmul.f32 %v1559, 0.16666667
    %v1976 = vmul.f32 %v1560, 0.16666667
    %v1977 = vmul.f32 %v1561, 0.16666667
    %v1978 = vmul.f32 %v1562, 0.16666667
    %v1979 = vmul.f32 %v1563, 0.16666667
    %v1980 = vmul.f32 %v1564, 0.16666667
    %v1981 = vmul.f32 %v1565, 0.16666667
    %v1982 = vmul.f32 %v1566, 0.16666667
    %v1983 = vmul.f32 %v1567, 0.16666667
    %v1984 = vmul.f32 %v1568, 0.16666667
    %v1985 = vmul.f32 %v1569, 0.16666667
    %v1986 = vmul.f32 %v1570, 0.16666667
    %v1987 = vmul.f32 %v1571, 0.16666667
    %v1988 = vmul.f32 %v1572, 0.16666667
    %v1989 = vmul.f32 %v1573, 0.16666667
    %v1990 = vmul.f32 %v1574, 0.16666667
    %v1991 = vmul.f32 %v1575, 0.16666667
    %v1992 = vmul.f32 %v1576, 0.16666667
    %v1993 = vmul.f32 %v1577, 0.16666667
    %v1994 = vmul.f32 %v1578, 0.16666667
    %v1995 = vmul.f32 %v1579, 0.16666667
    %v1996 = vmul.f32 %v1580, 0.16666667
    %v1997 = vmul.f32 %v1581, 0.16666667
    %v1998 = vmul.f32 %v1582, 0.16666667
    %v1999 = vmul.f32 %v1583, 0.16666667
    %v2000 = vmul.f32 %v1584, 0.16666667
    %v2001 = vmul.f32 %v1585, 0.16666667
    %v2002 = vmul.f32 %v1586, 0.16666667
    %v2003 = vmul.f32 %v1587, 0.16666667
    %v2004 = vmul.f32 %v1588, 0.16666667
    %v2005 = vmul.f32 %v1589, 0.16666667
    %v2006 = vmul.f32 %v1590, 0.16666667
    %v2007 = vmul.f32 %v1591, 0.16666667
    %v2008 = vmul.f32 %v1592, 0.16666667
    %v2009 = vmul.f32 %v1593, 0.16666667
    %v2010 = vmul.f32 %v1594, 0.16666667
    %v2011 = vmul.f32 %v1595, 0.16666667
    %v2012 = vmul.f32 %v1596, 0.16666667
    %v2013 = vmul.f32 %v1597, 0.16666667
    %v2014 = vmul.f32 %v1598, 0.16666667
    %v2015 = vmul.f32 %v1599, 0.16666667
    %v2016 = vmul.f32 %v1600, 0.16666667
    %v2017 = vmul.f32 %v1601, 0.16666667
    %v2018 = vmul.f32 %v1602, 0.16666667
    %v2019 = vmul.f32 %v1603, 0.16666667
    %v2020 = vmul.f32 %v1604, 0.16666667
    %v2021 = vmul.f32 %v1605, 0.16666667
    %v2022 = vmul.f32 %v1606, 0.16666667
    %v2023 = vmul.f32 %v1607, 0.16666667
    %v2024 = vmul.f32 %v1608, 0.16666667
    %v2025 = vmul.f32 %v1609, 0.16666667
    %v2026 = vmul.f32 %v1610, 0.16666667
    %v2027 = vmul.f32 %v1611, 0.16666667
    %v2028 = vmul.f32 %v1612, 0.16666667
    %v2029 = vmul.f32 %v1613, 0.16666667
    %v2030 = vmul.f32 %v1614, 0.16666667
    %v2031 = vmul.f32 %v1615, 0.16666667
    %v2032 = vmul.f32 %v1616, 0.16666667
    %v2033 = vmul.f32 %v1617, 0.16666667
    %v2034 = vmul.f32 %v1618, 0.16666667
    %v2035 = vmul.f32 %v1619, 0.16666667
    %v2036 = vmul.f32 %v1620, 0.16666667
    %v2037 = vmul.f32 %v1621, 0.16666667
    %v2038 = vmul.f32 %v1622, 0.16666667
    %v2039 = vmul.f32 %v1623, 0.16666667
    %v2040 = vmul.f32 %v1624, 0.16666667
    %v2041 = vmul.f32 %v1625, 0.16666667
    %v2042 = vmul.f32 %v1626, 0.16666667
    %v2043 = vmul.f32 %v1627, 0.16666667
    %v2044 = vmul.f32 %v1628, 0.16666667
    %v2045 = vmul.f32 %v1629, 0.16666667
    %v2046 = vmul.f32 %v1630, 0.16666667
    %v2047 = vmul.f32 %v1631, 0.16666667
    %v2048 = vmul.f32 %v1632, 0.16666667
    %v2049 = vmul.f32 %v1633, 0.16666667
    %v2050 = vmul.f32 %v1634, 0.16666667
    %v2051 = vmul.f32 %v1635, 0.16666667
    %v2052 = vmul.f32 %v1636, 0.16666667
    %v2053 = vmul.f32 %v1637, 0.16666667
    %v2054 = vmul.f32 %v1638, 0.16666667
    %v2055 = vmul.f32 %v1639, 0.16666667
    %v2056 = vmul.f32 %v1640, 0.16666667
    %v2057 = vmul.f32 %v1641, 0.16666667
    %v2058 = vmul.f32 %v1642, 0.16666667
    %v2059 = vmul.f32 %v1643, 0.16666667
    %v2060 = vmul.f32 %v1644, 0.16666667
    %v2061 = vmul.f32 %v1645, 0.16666667
    %v2062 = vmul.f32 %v1646, 0.16666667
    %v2063 = vmul.f32 %v1647, 0.16666667
    %v2064 = vmul.f32 %v1648, 0.16666667
    %v2065 = vmul.f32 %v1649, 0.16666667
    %v2066 = vmul.f32 %v1650, 0.16666667
    %v2067 = vmul.f32 %v1651, 0.16666667
    %v2068 = vmul.f32 %v1652, 0.16666667
    %v2069 = vmul.f32 %v1653, 0.16666667
    %v2070 = vmul.f32 %v1654, 0.16666667
    %v2071 = vmul.f32 %v1655, 0.16666667
    %v2072 = vmul.f32 %v1656, 0.16666667
    %v2073 = vmul.f32 %v1657, 0.16666667
    %v2074 = vmul.f32 %v1658, 0.16666667
    %v2075 = vmul.f32 %v1659, 0.16666667
    %v2076 = vmul.f32 %v1660, 0.16666667
    %v2077 = vmul.f32 %v1661, 0.16666667
    %v2078 = vmul.f32 %v1662, 0.16666667
    %v2079 = vmul.f32 %v1663, 0.16666667
    %v2080 = vmul.f32 %v1664, 0.16666667
    %v2081 = vmul.f32 %v1665, 0.16666667
    %v2082 = vmul.f32 %v1666, 0.16666667
    %v2083 = vmul.f32 %v1667, 0.16666667
    %v2084 = vmul.f32 %v1668, 0.16666667
    %v2085 = vmul.f32 %v1669, 0.16666667
    %v2086 = vmul.f32 %v1670, 0.16666667
    %v2087 = vmul.f32 %v1671, 0.16666667
    %v2088 = vmul.f32 %v1672, 0.16666667
    %v2089 = vmul.f32 %v1673, 0.16666667
    %v2090 = vmul.f32 %v1674, 0.16666667
    %v2091 = vmul.f32 %v1675, 0.16666667
    %v2092 = vmul.f32 %v1676, 0.16666667
    %v2093 = vmul.f32 %v1677, 0.16666667
    %v2094 = vmul.f32 %v1678, 0.16666667
    %v2095 = vmul.f32 %v1679, 0.16666667
    %v2096 = vmul.f32 %v1680, 0.16666667
    %v2097 = vmul.f32 %v1681, 0.16666667
    %v2098 = vmul.f32 %v1682, 0.16666667
    %v2099 = vmul.f32 %v1683, 0.16666667
    %v2100 = vmul.f32 %v1684, 0.16666667
    %v2101 = vmul.f32 %v1685, 0.16666667
    %v2102 = vmul.f32 %v1686, 0.16666667
    %2103 = vst [vmem:[#allocation5] sm:$0xff] %v1687
    %2104 = vst [vmem:[#allocation5 + $0x8] sm:$0xff] %v1688
    %2105 = vst [vmem:[#allocation5 + $0x10] sm:$0xff] %v1689
    %2106 = vst [vmem:[#allocation5 + $0x18] sm:$0xff] %v1690
    %2107 = vst [vmem:[#allocation5 + $0x20] sm:$0xff] %v1691
    %2108 = vst [vmem:[#allocation5 + $0x28] sm:$0xff] %v1692
    %2109 = vst [vmem:[#allocation5 + $0x30] sm:$0xff] %v1693
    %2110 = vst [vmem:[#allocation5 + $0x38] sm:$0xff] %v1694
    %2111 = vst [vmem:[#allocation5 + $0x40] sm:$0xff] %v1695
    %2112 = vst [vmem:[#allocation5 + $0x48] sm:$0xff] %v1696
    %2113 = vst [vmem:[#allocation5 + $0x50] sm:$0xff] %v1697
    %2114 = vst [vmem:[#allocation5 + $0x58] sm:$0xff] %v1698
    %2115 = vst [vmem:[#allocation5 + $0x60] sm:$0xff] %v1699
    %2116 = vst [vmem:[#allocation5 + $0x68] sm:$0xff] %v1700
    %2117 = vst [vmem:[#allocation5 + $0x70] sm:$0xff] %v1701
    %2118 = vst [vmem:[#allocation5 + $0x78] sm:$0xff] %v1702
    %2119 = vst [vmem:[#allocation5 + $0x80] sm:$0xff] %v1703
    %2120 = vst [vmem:[#allocation5 + $0x88] sm:$0xff] %v1704
    %2121 = vst [vmem:[#allocation5 + $0x90] sm:$0xff] %v1705
    %2122 = vst [vmem:[#allocation5 + $0x98] sm:$0xff] %v1706
    %2123 = vst [vmem:[#allocation5 + $0xa0] sm:$0xff] %v1707
    %2124 = vst [vmem:[#allocation5 + $0xa8] sm:$0xff] %v1708
    %2125 = vst [vmem:[#allocation5 + $0xb0] sm:$0xff] %v1709
    %2126 = vst [vmem:[#allocation5 + $0xb8] sm:$0xff] %v1710
    %2127 = vst [vmem:[#allocation5 + $0xc0] sm:$0xff] %v1711
    %2128 = vst [vmem:[#allocation5 + $0xc8] sm:$0xff] %v1712
    %2129 = vst [vmem:[#allocation5 + $0xd0] sm:$0xff] %v1713
    %2130 = vst [vmem:[#allocation5 + $0xd8] sm:$0xff] %v1714
    %2131 = vst [vmem:[#allocation5 + $0xe0] sm:$0xff] %v1715
    %2132 = vst [vmem:[#allocation5 + $0xe8] sm:$0xff] %v1716
    %2133 = vst [vmem:[#allocation5 + $0xf0] sm:$0xff] %v1717
    %2134 = vst [vmem:[#allocation5 + $0xf8] sm:$0xff] %v1718
    %2135 = vst [vmem:[#allocation5 + $0x100] sm:$0xff] %v1719
    %2136 = vst [vmem:[#allocation5 + $0x108] sm:$0xff] %v1720
    %2137 = vst [vmem:[#allocation5 + $0x110] sm:$0xff] %v1721
    %2138 = vst [vmem:[#allocation5 + $0x118] sm:$0xff] %v1722
    %2139 = vst [vmem:[#allocation5 + $0x120] sm:$0xff] %v1723
    %2140 = vst [vmem:[#allocation5 + $0x128] sm:$0xff] %v1724
    %2141 = vst [vmem:[#allocation5 + $0x130] sm:$0xff] %v1725
    %2142 = vst [vmem:[#allocation5 + $0x138] sm:$0xff] %v1726
    %2143 = vst [vmem:[#allocation5 + $0x140] sm:$0xff] %v1727
    %2144 = vst [vmem:[#allocation5 + $0x148] sm:$0xff] %v1728
    %2145 = vst [vmem:[#allocation5 + $0x150] sm:$0xff] %v1729
    %2146 = vst [vmem:[#allocation5 + $0x158] sm:$0xff] %v1730
    %2147 = vst [vmem:[#allocation5 + $0x160] sm:$0xff] %v1731
    %2148 = vst [vmem:[#allocation5 + $0x168] sm:$0xff] %v1732
    %2149 = vst [vmem:[#allocation5 + $0x170] sm:$0xff] %v1733
    %2150 = vst [vmem:[#allocation5 + $0x178] sm:$0xff] %v1734
    %2151 = vst [vmem:[#allocation5 + $0x180] sm:$0xff] %v1735
    %2152 = vst [vmem:[#allocation5 + $0x188] sm:$0xff] %v1736
    %2153 = vst [vmem:[#allocation5 + $0x190] sm:$0xff] %v1737
    %2154 = vst [vmem:[#allocation5 + $0x198] sm:$0xff] %v1738
    %2155 = vst [vmem:[#allocation5 + $0x1a0] sm:$0xff] %v1739
    %2156 = vst [vmem:[#allocation5 + $0x1a8] sm:$0xff] %v1740
    %2157 = vst [vmem:[#allocation5 + $0x1b0] sm:$0xff] %v1741
    %2158 = vst [vmem:[#allocation5 + $0x1b8] sm:$0xff] %v1742
    %2159 = vst [vmem:[#allocation5 + $0x1c0] sm:$0xff] %v1743
    %2160 = vst [vmem:[#allocation5 + $0x1c8] sm:$0xff] %v1744
    %2161 = vst [vmem:[#allocation5 + $0x1d0] sm:$0xff] %v1745
    %2162 = vst [vmem:[#allocation5 + $0x1d8] sm:$0xff] %v1746
    %2163 = vst [vmem:[#allocation5 + $0x1e0] sm:$0xff] %v1747
    %2164 = vst [vmem:[#allocation5 + $0x1e8] sm:$0xff] %v1748
    %2165 = vst [vmem:[#allocation5 + $0x1f0] sm:$0xff] %v1749
    %2166 = vst [vmem:[#allocation5 + $0x1f8] sm:$0xff] %v1750
    %2167 = vst [vmem:[#allocation5 + $0x200] sm:$0xff] %v1751
    %2168 = vst [vmem:[#allocation5 + $0x208] sm:$0xff] %v1752
    %2169 = vst [vmem:[#allocation5 + $0x210] sm:$0xff] %v1753
    %2170 = vst [vmem:[#allocation5 + $0x218] sm:$0xff] %v1754
    %2171 = vst [vmem:[#allocation5 + $0x220] sm:$0xff] %v1755
    %2172 = vst [vmem:[#allocation5 + $0x228] sm:$0xff] %v1756
    %2173 = vst [vmem:[#allocation5 + $0x230] sm:$0xff] %v1757
    %2174 = vst [vmem:[#allocation5 + $0x238] sm:$0xff] %v1758
    %2175 = vst [vmem:[#allocation5 + $0x240] sm:$0xff] %v1759
    %2176 = vst [vmem:[#allocation5 + $0x248] sm:$0xff] %v1760
    %2177 = vst [vmem:[#allocation5 + $0x250] sm:$0xff] %v1761
    %2178 = vst [vmem:[#allocation5 + $0x258] sm:$0xff] %v1762
    %2179 = vst [vmem:[#allocation5 + $0x260] sm:$0xff] %v1763
    %2180 = vst [vmem:[#allocation5 + $0x268] sm:$0xff] %v1764
    %2181 = vst [vmem:[#allocation5 + $0x270] sm:$0xff] %v1765
    %2182 = vst [vmem:[#allocation5 + $0x278] sm:$0xff] %v1766
    %2183 = vst [vmem:[#allocation5 + $0x280] sm:$0xff] %v1767
    %2184 = vst [vmem:[#allocation5 + $0x288] sm:$0xff] %v1768
    %2185 = vst [vmem:[#allocation5 + $0x290] sm:$0xff] %v1769
    %2186 = vst [vmem:[#allocation5 + $0x298] sm:$0xff] %v1770
    %2187 = vst [vmem:[#allocation5 + $0x2a0] sm:$0xff] %v1771
    %2188 = vst [vmem:[#allocation5 + $0x2a8] sm:$0xff] %v1772
    %2189 = vst [vmem:[#allocation5 + $0x2b0] sm:$0xff] %v1773
    %2190 = vst [vmem:[#allocation5 + $0x2b8] sm:$0xff] %v1774
    %2191 = vst [vmem:[#allocation5 + $0x2c0] sm:$0xff] %v1775
    %2192 = vst [vmem:[#allocation5 + $0x2c8] sm:$0xff] %v1776
    %2193 = vst [vmem:[#allocation5 + $0x2d0] sm:$0xff] %v1777
    %2194 = vst [vmem:[#allocation5 + $0x2d8] sm:$0xff] %v1778
    %2195 = vst [vmem:[#allocation5 + $0x2e0] sm:$0xff] %v1779
    %2196 = vst [vmem:[#allocation5 + $0x2e8] sm:$0xff] %v1780
    %2197 = vst [vmem:[#allocation5 + $0x2f0] sm:$0xff] %v1781
    %2198 = vst [vmem:[#allocation5 + $0x2f8] sm:$0xff] %v1782
    %2199 = vst [vmem:[#allocation5 + $0x300] sm:$0xff] %v1783
    %2200 = vst [vmem:[#allocation5 + $0x308] sm:$0xff] %v1784
    %2201 = vst [vmem:[#allocation5 + $0x310] sm:$0xff] %v1785
    %2202 = vst [vmem:[#allocation5 + $0x318] sm:$0xff] %v1786
    %2203 = vst [vmem:[#allocation5 + $0x320] sm:$0xff] %v1787
    %2204 = vst [vmem:[#allocation5 + $0x328] sm:$0xff] %v1788
    %2205 = vst [vmem:[#allocation5 + $0x330] sm:$0xff] %v1789
    %2206 = vst [vmem:[#allocation5 + $0x338] sm:$0xff] %v1790
    %2207 = vst [vmem:[#allocation5 + $0x340] sm:$0xff] %v1791
    %2208 = vst [vmem:[#allocation5 + $0x348] sm:$0xff] %v1792
    %2209 = vst [vmem:[#allocation5 + $0x350] sm:$0xff] %v1793
    %2210 = vst [vmem:[#allocation5 + $0x358] sm:$0xff] %v1794
    %2211 = vst [vmem:[#allocation5 + $0x360] sm:$0xff] %v1795
    %2212 = vst [vmem:[#allocation5 + $0x368] sm:$0xff] %v1796
    %2213 = vst [vmem:[#allocation5 + $0x370] sm:$0xff] %v1797
    %2214 = vst [vmem:[#allocation5 + $0x378] sm:$0xff] %v1798
    %2215 = vst [vmem:[#allocation5 + $0x380] sm:$0xff] %v1799
    %2216 = vst [vmem:[#allocation5 + $0x388] sm:$0xff] %v1800
    %2217 = vst [vmem:[#allocation5 + $0x390] sm:$0xff] %v1801
    %2218 = vst [vmem:[#allocation5 + $0x398] sm:$0xff] %v1802
    %2219 = vst [vmem:[#allocation5 + $0x3a0] sm:$0xff] %v1803
    %2220 = vst [vmem:[#allocation5 + $0x3a8] sm:$0xff] %v1804
    %2221 = vst [vmem:[#allocation5 + $0x3b0] sm:$0xff] %v1805
    %2222 = vst [vmem:[#allocation5 + $0x3b8] sm:$0xff] %v1806
    %2223 = vst [vmem:[#allocation5 + $0x3c0] sm:$0xff] %v1807
    %2224 = vst [vmem:[#allocation5 + $0x3c8] sm:$0xff] %v1808
    %2225 = vst [vmem:[#allocation5 + $0x3d0] sm:$0xff] %v1809
    %2226 = vst [vmem:[#allocation5 + $0x3d8] sm:$0xff] %v1810
    %2227 = vst [vmem:[#allocation5 + $0x3e0] sm:$0xff] %v1811
    %2228 = vst [vmem:[#allocation5 + $0x3e8] sm:$0xff] %v1812
    %2229 = vst [vmem:[#allocation5 + $0x3f0] sm:$0xff] %v1813
    %2230 = vst [vmem:[#allocation5 + $0x3f8] sm:$0xff] %v1814
    %2231 = vst [vmem:[#allocation5 + $0x400] sm:$0xff] %v1815
    %2232 = vst [vmem:[#allocation5 + $0x408] sm:$0xff] %v1816
    %2233 = vst [vmem:[#allocation5 + $0x410] sm:$0xff] %v1817
    %2234 = vst [vmem:[#allocation5 + $0x418] sm:$0xff] %v1818
    %2235 = vst [vmem:[#allocation5 + $0x420] sm:$0xff] %v1819
    %2236 = vst [vmem:[#allocation5 + $0x428] sm:$0xff] %v1820
    %2237 = vst [vmem:[#allocation5 + $0x430] sm:$0xff] %v1821
    %2238 = vst [vmem:[#allocation5 + $0x438] sm:$0xff] %v1822
    %2239 = vst [vmem:[#allocation5 + $0x440] sm:$0xff] %v1823
    %2240 = vst [vmem:[#allocation5 + $0x448] sm:$0xff] %v1824
    %2241 = vst [vmem:[#allocation5 + $0x450] sm:$0xff] %v1825
    %2242 = vst [vmem:[#allocation5 + $0x458] sm:$0xff] %v1826
    %2243 = vst [vmem:[#allocation5 + $0x460] sm:$0xff] %v1827
    %2244 = vst [vmem:[#allocation5 + $0x468] sm:$0xff] %v1828
    %2245 = vst [vmem:[#allocation5 + $0x470] sm:$0xff] %v1829
    %2246 = vst [vmem:[#allocation5 + $0x478] sm:$0xff] %v1830
    %2247 = vst [vmem:[#allocation5 + $0x480] sm:$0xff] %v1831
    %2248 = vst [vmem:[#allocation5 + $0x488] sm:$0xff] %v1832
    %2249 = vst [vmem:[#allocation5 + $0x490] sm:$0xff] %v1833
    %2250 = vst [vmem:[#allocation5 + $0x498] sm:$0xff] %v1834
    %2251 = vst [vmem:[#allocation5 + $0x4a0] sm:$0xff] %v1835
    %2252 = vst [vmem:[#allocation5 + $0x4a8] sm:$0xff] %v1836
    %2253 = vst [vmem:[#allocation5 + $0x4b0] sm:$0xff] %v1837
    %2254 = vst [vmem:[#allocation5 + $0x4b8] sm:$0xff] %v1838
    %2255 = vst [vmem:[#allocation5 + $0x4c0] sm:$0xff] %v1839
    %2256 = vst [vmem:[#allocation5 + $0x4c8] sm:$0xff] %v1840
    %2257 = vst [vmem:[#allocation5 + $0x4d0] sm:$0xff] %v1841
    %2258 = vst [vmem:[#allocation5 + $0x4d8] sm:$0xff] %v1842
    %2259 = vst [vmem:[#allocation5 + $0x4e0] sm:$0xff] %v1843
    %2260 = vst [vmem:[#allocation5 + $0x4e8] sm:$0xff] %v1844
    %2261 = vst [vmem:[#allocation5 + $0x4f0] sm:$0xff] %v1845
    %2262 = vst [vmem:[#allocation5 + $0x4f8] sm:$0xff] %v1846
    %2263 = vst [vmem:[#allocation5 + $0x500] sm:$0xff] %v1847
    %2264 = vst [vmem:[#allocation5 + $0x508] sm:$0xff] %v1848
    %2265 = vst [vmem:[#allocation5 + $0x510] sm:$0xff] %v1849
    %2266 = vst [vmem:[#allocation5 + $0x518] sm:$0xff] %v1850
    %2267 = vst [vmem:[#allocation5 + $0x520] sm:$0xff] %v1851
    %2268 = vst [vmem:[#allocation5 + $0x528] sm:$0xff] %v1852
    %2269 = vst [vmem:[#allocation5 + $0x530] sm:$0xff] %v1853
    %2270 = vst [vmem:[#allocation5 + $0x538] sm:$0xff] %v1854
    %2271 = vst [vmem:[#allocation5 + $0x540] sm:$0xff] %v1855
    %2272 = vst [vmem:[#allocation5 + $0x548] sm:$0xff] %v1856
    %2273 = vst [vmem:[#allocation5 + $0x550] sm:$0xff] %v1857
    %2274 = vst [vmem:[#allocation5 + $0x558] sm:$0xff] %v1858
    %2275 = vst [vmem:[#allocation5 + $0x560] sm:$0xff] %v1859
    %2276 = vst [vmem:[#allocation5 + $0x568] sm:$0xff] %v1860
    %2277 = vst [vmem:[#allocation5 + $0x570] sm:$0xff] %v1861
    %2278 = vst [vmem:[#allocation5 + $0x578] sm:$0xff] %v1862
    %2279 = vst [vmem:[#allocation5 + $0x580] sm:$0xff] %v1863
    %2280 = vst [vmem:[#allocation5 + $0x588] sm:$0xff] %v1864
    %2281 = vst [vmem:[#allocation5 + $0x590] sm:$0xff] %v1865
    %2282 = vst [vmem:[#allocation5 + $0x598] sm:$0xff] %v1866
    %2283 = vst [vmem:[#allocation5 + $0x5a0] sm:$0xff] %v1867
    %2284 = vst [vmem:[#allocation5 + $0x5a8] sm:$0xff] %v1868
    %2285 = vst [vmem:[#allocation5 + $0x5b0] sm:$0xff] %v1869
    %2286 = vst [vmem:[#allocation5 + $0x5b8] sm:$0xff] %v1870
    %2287 = vst [vmem:[#allocation5 + $0x5c0] sm:$0xff] %v1871
    %2288 = vst [vmem:[#allocation5 + $0x5c8] sm:$0xff] %v1872
    %2289 = vst [vmem:[#allocation5 + $0x5d0] sm:$0xff] %v1873
    %2290 = vst [vmem:[#allocation5 + $0x5d8] sm:$0xff] %v1874
    %2291 = vst [vmem:[#allocation5 + $0x5e0] sm:$0xff] %v1875
    %2292 = vst [vmem:[#allocation5 + $0x5e8] sm:$0xff] %v1876
    %2293 = vst [vmem:[#allocation5 + $0x5f0] sm:$0xff] %v1877
    %2294 = vst [vmem:[#allocation5 + $0x5f8] sm:$0xff] %v1878
    %2295 = vst [vmem:[#allocation5 + $0x600] sm:$0xff] %v1879
    %2296 = vst [vmem:[#allocation5 + $0x608] sm:$0xff] %v1880
    %2297 = vst [vmem:[#allocation5 + $0x610] sm:$0xff] %v1881
    %2298 = vst [vmem:[#allocation5 + $0x618] sm:$0xff] %v1882
    %2299 = vst [vmem:[#allocation5 + $0x620] sm:$0xff] %v1883
    %2300 = vst [vmem:[#allocation5 + $0x628] sm:$0xff] %v1884
    %2301 = vst [vmem:[#allocation5 + $0x630] sm:$0xff] %v1885
    %2302 = vst [vmem:[#allocation5 + $0x638] sm:$0xff] %v1886
    %2303 = vst [vmem:[#allocation5 + $0x640] sm:$0xff] %v1887
    %2304 = vst [vmem:[#allocation5 + $0x648] sm:$0xff] %v1888
    %2305 = vst [vmem:[#allocation5 + $0x650] sm:$0xff] %v1889
    %2306 = vst [vmem:[#allocation5 + $0x658] sm:$0xff] %v1890
    %2307 = vst [vmem:[#allocation5 + $0x660] sm:$0xff] %v1891
    %2308 = vst [vmem:[#allocation5 + $0x668] sm:$0xff] %v1892
    %2309 = vst [vmem:[#allocation5 + $0x670] sm:$0xff] %v1893
    %2310 = vst [vmem:[#allocation5 + $0x678] sm:$0xff] %v1894
    %2311 = vst [vmem:[#allocation5 + $0x680] sm:$0xff] %v1895
    %2312 = vst [vmem:[#allocation5 + $0x688] sm:$0xff] %v1896
    %2313 = vst [vmem:[#allocation5 + $0x690] sm:$0xff] %v1897
    %2314 = vst [vmem:[#allocation5 + $0x698] sm:$0xff] %v1898
    %2315 = vst [vmem:[#allocation5 + $0x6a0] sm:$0xff] %v1899
    %2316 = vst [vmem:[#allocation5 + $0x6a8] sm:$0xff] %v1900
    %2317 = vst [vmem:[#allocation5 + $0x6b0] sm:$0xff] %v1901
    %2318 = vst [vmem:[#allocation5 + $0x6b8] sm:$0xff] %v1902
    %2319 = vst [vmem:[#allocation5 + $0x6c0] sm:$0xff] %v1903
    %2320 = vst [vmem:[#allocation5 + $0x6c8] sm:$0xff] %v1904
    %2321 = vst [vmem:[#allocation5 + $0x6d0] sm:$0xff] %v1905
    %2322 = vst [vmem:[#allocation5 + $0x6d8] sm:$0xff] %v1906
    %2323 = vst [vmem:[#allocation5 + $0x6e0] sm:$0xff] %v1907
    %2324 = vst [vmem:[#allocation5 + $0x6e8] sm:$0xff] %v1908
    %2325 = vst [vmem:[#allocation5 + $0x6f0] sm:$0xff] %v1909
    %2326 = vst [vmem:[#allocation5 + $0x6f8] sm:$0xff] %v1910
    %2327 = vst [vmem:[#allocation5 + $0x700] sm:$0xff] %v1911
    %2328 = vst [vmem:[#allocation5 + $0x708] sm:$0xff] %v1912
    %2329 = vst [vmem:[#allocation5 + $0x710] sm:$0xff] %v1913
    %2330 = vst [vmem:[#allocation5 + $0x718] sm:$0xff] %v1914
    %2331 = vst [vmem:[#allocation5 + $0x720] sm:$0xff] %v1915
    %2332 = vst [vmem:[#allocation5 + $0x728] sm:$0xff] %v1916
    %2333 = vst [vmem:[#allocation5 + $0x730] sm:$0xff] %v1917
    %2334 = vst [vmem:[#allocation5 + $0x738] sm:$0xff] %v1918
    %2335 = vst [vmem:[#allocation5 + $0x740] sm:$0xff] %v1919
    %2336 = vst [vmem:[#allocation5 + $0x748] sm:$0xff] %v1920
    %2337 = vst [vmem:[#allocation5 + $0x750] sm:$0xff] %v1921
    %2338 = vst [vmem:[#allocation5 + $0x758] sm:$0xff] %v1922
    %2339 = vst [vmem:[#allocation5 + $0x760] sm:$0xff] %v1923
    %2340 = vst [vmem:[#allocation5 + $0x768] sm:$0xff] %v1924
    %2341 = vst [vmem:[#allocation5 + $0x770] sm:$0xff] %v1925
    %2342 = vst [vmem:[#allocation5 + $0x778] sm:$0xff] %v1926
    %2343 = vst [vmem:[#allocation5 + $0x780] sm:$0xff] %v1927
    %2344 = vst [vmem:[#allocation5 + $0x788] sm:$0xff] %v1928
    %2345 = vst [vmem:[#allocation5 + $0x790] sm:$0xff] %v1929
    %2346 = vst [vmem:[#allocation5 + $0x798] sm:$0xff] %v1930
    %2347 = vst [vmem:[#allocation5 + $0x7a0] sm:$0xff] %v1931
    %2348 = vst [vmem:[#allocation5 + $0x7a8] sm:$0xff] %v1932
    %2349 = vst [vmem:[#allocation5 + $0x7b0] sm:$0xff] %v1933
    %2350 = vst [vmem:[#allocation5 + $0x7b8] sm:$0xff] %v1934
    %2351 = vst [vmem:[#allocation5 + $0x7c0] sm:$0xff] %v1935
    %2352 = vst [vmem:[#allocation5 + $0x7c8] sm:$0xff] %v1936
    %2353 = vst [vmem:[#allocation5 + $0x7d0] sm:$0xff] %v1937
    %2354 = vst [vmem:[#allocation5 + $0x7d8] sm:$0xff] %v1938
    %2355 = vst [vmem:[#allocation5 + $0x7e0] sm:$0xff] %v1939
    %2356 = vst [vmem:[#allocation5 + $0x7e8] sm:$0xff] %v1940
    %2357 = vst [vmem:[#allocation5 + $0x7f0] sm:$0xff] %v1941
    %2358 = vst [vmem:[#allocation5 + $0x7f8] sm:$0xff] %v1942
    %2359 = vst [vmem:[#allocation5 + $0x800] sm:$0xff] %v1943
    %2360 = vst [vmem:[#allocation5 + $0x808] sm:$0xff] %v1944
    %2361 = vst [vmem:[#allocation5 + $0x810] sm:$0xff] %v1945
    %2362 = vst [vmem:[#allocation5 + $0x818] sm:$0xff] %v1946
    %2363 = vst [vmem:[#allocation5 + $0x820] sm:$0xff] %v1947
    %2364 = vst [vmem:[#allocation5 + $0x828] sm:$0xff] %v1948
    %2365 = vst [vmem:[#allocation5 + $0x830] sm:$0xff] %v1949
    %2366 = vst [vmem:[#allocation5 + $0x838] sm:$0xff] %v1950
    %2367 = vst [vmem:[#allocation5 + $0x840] sm:$0xff] %v1951
    %2368 = vst [vmem:[#allocation5 + $0x848] sm:$0xff] %v1952
    %2369 = vst [vmem:[#allocation5 + $0x850] sm:$0xff] %v1953
    %2370 = vst [vmem:[#allocation5 + $0x858] sm:$0xff] %v1954
    %2371 = vst [vmem:[#allocation5 + $0x860] sm:$0xff] %v1955
    %2372 = vst [vmem:[#allocation5 + $0x868] sm:$0xff] %v1956
    %2373 = vst [vmem:[#allocation5 + $0x870] sm:$0xff] %v1957
    %2374 = vst [vmem:[#allocation5 + $0x878] sm:$0xff] %v1958
    %2375 = vst [vmem:[#allocation5 + $0x880] sm:$0xff] %v1959
    %2376 = vst [vmem:[#allocation5 + $0x888] sm:$0xff] %v1960
    %2377 = vst [vmem:[#allocation5 + $0x890] sm:$0xff] %v1961
    %2378 = vst [vmem:[#allocation5 + $0x898] sm:$0xff] %v1962
    %2379 = vst [vmem:[#allocation5 + $0x8a0] sm:$0xff] %v1963
    %2380 = vst [vmem:[#allocation5 + $0x8a8] sm:$0xff] %v1964
    %2381 = vst [vmem:[#allocation5 + $0x8b0] sm:$0xff] %v1965
    %2382 = vst [vmem:[#allocation5 + $0x8b8] sm:$0xff] %v1966
    %2383 = vst [vmem:[#allocation5 + $0x8c0] sm:$0xff] %v1967
    %2384 = vst [vmem:[#allocation5 + $0x8c8] sm:$0xff] %v1968
    %2385 = vst [vmem:[#allocation5 + $0x8d0] sm:$0xff] %v1969
    %2386 = vst [vmem:[#allocation5 + $0x8d8] sm:$0xff] %v1970
    %2387 = vst [vmem:[#allocation5 + $0x8e0] sm:$0xff] %v1971
    %2388 = vst [vmem:[#allocation5 + $0x8e8] sm:$0xff] %v1972
    %2389 = vst [vmem:[#allocation5 + $0x8f0] sm:$0xff] %v1973
    %2390 = vst [vmem:[#allocation5 + $0x8f8] sm:$0xff] %v1974
    %2391 = vst [vmem:[#allocation5 + $0x900] sm:$0xff] %v1975
    %2392 = vst [vmem:[#allocation5 + $0x908] sm:$0xff] %v1976
    %2393 = vst [vmem:[#allocation5 + $0x910] sm:$0xff] %v1977
    %2394 = vst [vmem:[#allocation5 + $0x918] sm:$0xff] %v1978
    %2395 = vst [vmem:[#allocation5 + $0x920] sm:$0xff] %v1979
    %2396 = vst [vmem:[#allocation5 + $0x928] sm:$0xff] %v1980
    %2397 = vst [vmem:[#allocation5 + $0x930] sm:$0xff] %v1981
    %2398 = vst [vmem:[#allocation5 + $0x938] sm:$0xff] %v1982
    %2399 = vst [vmem:[#allocation5 + $0x940] sm:$0xff] %v1983
    %2400 = vst [vmem:[#allocation5 + $0x948] sm:$0xff] %v1984
    %2401 = vst [vmem:[#allocation5 + $0x950] sm:$0xff] %v1985
    %2402 = vst [vmem:[#allocation5 + $0x958] sm:$0xff] %v1986
    %2403 = vst [vmem:[#allocation5 + $0x960] sm:$0xff] %v1987
    %2404 = vst [vmem:[#allocation5 + $0x968] sm:$0xff] %v1988
    %2405 = vst [vmem:[#allocation5 + $0x970] sm:$0xff] %v1989
    %2406 = vst [vmem:[#allocation5 + $0x978] sm:$0xff] %v1990
    %2407 = vst [vmem:[#allocation5 + $0x980] sm:$0xff] %v1991
    %2408 = vst [vmem:[#allocation5 + $0x988] sm:$0xff] %v1992
    %2409 = vst [vmem:[#allocation5 + $0x990] sm:$0xff] %v1993
    %2410 = vst [vmem:[#allocation5 + $0x998] sm:$0xff] %v1994
    %2411 = vst [vmem:[#allocation5 + $0x9a0] sm:$0xff] %v1995
    %2412 = vst [vmem:[#allocation5 + $0x9a8] sm:$0xff] %v1996
    %2413 = vst [vmem:[#allocation5 + $0x9b0] sm:$0xff] %v1997
    %2414 = vst [vmem:[#allocation5 + $0x9b8] sm:$0xff] %v1998
    %2415 = vst [vmem:[#allocation5 + $0x9c0] sm:$0xff] %v1999
    %2416 = vst [vmem:[#allocation5 + $0x9c8] sm:$0xff] %v2000
    %2417 = vst [vmem:[#allocation5 + $0x9d0] sm:$0xff] %v2001
    %2418 = vst [vmem:[#allocation5 + $0x9d8] sm:$0xff] %v2002
    %2419 = vst [vmem:[#allocation5 + $0x9e0] sm:$0xff] %v2003
    %2420 = vst [vmem:[#allocation5 + $0x9e8] sm:$0xff] %v2004
    %2421 = vst [vmem:[#allocation5 + $0x9f0] sm:$0xff] %v2005
    %2422 = vst [vmem:[#allocation5 + $0x9f8] sm:$0xff] %v2006
    %2423 = vst [vmem:[#allocation5 + $0xa00] sm:$0xff] %v2007
    %2424 = vst [vmem:[#allocation5 + $0xa08] sm:$0xff] %v2008
    %2425 = vst [vmem:[#allocation5 + $0xa10] sm:$0xff] %v2009
    %2426 = vst [vmem:[#allocation5 + $0xa18] sm:$0xff] %v2010
    %2427 = vst [vmem:[#allocation5 + $0xa20] sm:$0xff] %v2011
    %2428 = vst [vmem:[#allocation5 + $0xa28] sm:$0xff] %v2012
    %2429 = vst [vmem:[#allocation5 + $0xa30] sm:$0xff] %v2013
    %2430 = vst [vmem:[#allocation5 + $0xa38] sm:$0xff] %v2014
    %2431 = vst [vmem:[#allocation5 + $0xa40] sm:$0xff] %v2015
    %2432 = vst [vmem:[#allocation5 + $0xa48] sm:$0xff] %v2016
    %2433 = vst [vmem:[#allocation5 + $0xa50] sm:$0xff] %v2017
    %2434 = vst [vmem:[#allocation5 + $0xa58] sm:$0xff] %v2018
    %2435 = vst [vmem:[#allocation5 + $0xa60] sm:$0xff] %v2019
    %2436 = vst [vmem:[#allocation5 + $0xa68] sm:$0xff] %v2020
    %2437 = vst [vmem:[#allocation5 + $0xa70] sm:$0xff] %v2021
    %2438 = vst [vmem:[#allocation5 + $0xa78] sm:$0xff] %v2022
    %2439 = vst [vmem:[#allocation5 + $0xa80] sm:$0xff] %v2023
    %2440 = vst [vmem:[#allocation5 + $0xa88] sm:$0xff] %v2024
    %2441 = vst [vmem:[#allocation5 + $0xa90] sm:$0xff] %v2025
    %2442 = vst [vmem:[#allocation5 + $0xa98] sm:$0xff] %v2026
    %2443 = vst [vmem:[#allocation5 + $0xaa0] sm:$0xff] %v2027
    %2444 = vst [vmem:[#allocation5 + $0xaa8] sm:$0xff] %v2028
    %2445 = vst [vmem:[#allocation5 + $0xab0] sm:$0xff] %v2029
    %2446 = vst [vmem:[#allocation5 + $0xab8] sm:$0xff] %v2030
    %2447 = vst [vmem:[#allocation5 + $0xac0] sm:$0xff] %v2031
    %2448 = vst [vmem:[#allocation5 + $0xac8] sm:$0xff] %v2032
    %2449 = vst [vmem:[#allocation5 + $0xad0] sm:$0xff] %v2033
    %2450 = vst [vmem:[#allocation5 + $0xad8] sm:$0xff] %v2034
    %2451 = vst [vmem:[#allocation5 + $0xae0] sm:$0xff] %v2035
    %2452 = vst [vmem:[#allocation5 + $0xae8] sm:$0xff] %v2036
    %2453 = vst [vmem:[#allocation5 + $0xaf0] sm:$0xff] %v2037
    %2454 = vst [vmem:[#allocation5 + $0xaf8] sm:$0xff] %v2038
    %2455 = vst [vmem:[#allocation5 + $0xb00] sm:$0xff] %v2039
    %2456 = vst [vmem:[#allocation5 + $0xb08] sm:$0xff] %v2040
    %2457 = vst [vmem:[#allocation5 + $0xb10] sm:$0xff] %v2041
    %2458 = vst [vmem:[#allocation5 + $0xb18] sm:$0xff] %v2042
    %2459 = vst [vmem:[#allocation5 + $0xb20] sm:$0xff] %v2043
    %2460 = vst [vmem:[#allocation5 + $0xb28] sm:$0xff] %v2044
    %2461 = vst [vmem:[#allocation5 + $0xb30] sm:$0xff] %v2045
    %2462 = vst [vmem:[#allocation5 + $0xb38] sm:$0xff] %v2046
    %2463 = vst [vmem:[#allocation5 + $0xb40] sm:$0xff] %v2047
    %2464 = vst [vmem:[#allocation5 + $0xb48] sm:$0xff] %v2048
    %2465 = vst [vmem:[#allocation5 + $0xb50] sm:$0xff] %v2049
    %2466 = vst [vmem:[#allocation5 + $0xb58] sm:$0xff] %v2050
    %2467 = vst [vmem:[#allocation5 + $0xb60] sm:$0xff] %v2051
    %2468 = vst [vmem:[#allocation5 + $0xb68] sm:$0xff] %v2052
    %2469 = vst [vmem:[#allocation5 + $0xb70] sm:$0xff] %v2053
    %2470 = vst [vmem:[#allocation5 + $0xb78] sm:$0xff] %v2054
    %2471 = vst [vmem:[#allocation5 + $0xb80] sm:$0xff] %v2055
    %2472 = vst [vmem:[#allocation5 + $0xb88] sm:$0xff] %v2056
    %2473 = vst [vmem:[#allocation5 + $0xb90] sm:$0xff] %v2057
    %2474 = vst [vmem:[#allocation5 + $0xb98] sm:$0xff] %v2058
    %2475 = vst [vmem:[#allocation5 + $0xba0] sm:$0xff] %v2059
    %2476 = vst [vmem:[#allocation5 + $0xba8] sm:$0xff] %v2060
    %2477 = vst [vmem:[#allocation5 + $0xbb0] sm:$0xff] %v2061
    %2478 = vst [vmem:[#allocation5 + $0xbb8] sm:$0xff] %v2062
    %2479 = vst [vmem:[#allocation5 + $0xbc0] sm:$0xff] %v2063
    %2480 = vst [vmem:[#allocation5 + $0xbc8] sm:$0xff] %v2064
    %2481 = vst [vmem:[#allocation5 + $0xbd0] sm:$0xff] %v2065
    %2482 = vst [vmem:[#allocation5 + $0xbd8] sm:$0xff] %v2066
    %2483 = vst [vmem:[#allocation5 + $0xbe0] sm:$0xff] %v2067
    %2484 = vst [vmem:[#allocation5 + $0xbe8] sm:$0xff] %v2068
    %2485 = vst [vmem:[#allocation5 + $0xbf0] sm:$0xff] %v2069
    %2486 = vst [vmem:[#allocation5 + $0xbf8] sm:$0xff] %v2070
    %2487 = vst [vmem:[#allocation5 + $0xc00] sm:$0xff] %v2071
    %2488 = vst [vmem:[#allocation5 + $0xc08] sm:$0xff] %v2072
    %2489 = vst [vmem:[#allocation5 + $0xc10] sm:$0xff] %v2073
    %2490 = vst [vmem:[#allocation5 + $0xc18] sm:$0xff] %v2074
    %2491 = vst [vmem:[#allocation5 + $0xc20] sm:$0xff] %v2075
    %2492 = vst [vmem:[#allocation5 + $0xc28] sm:$0xff] %v2076
    %2493 = vst [vmem:[#allocation5 + $0xc30] sm:$0xff] %v2077
    %2494 = vst [vmem:[#allocation5 + $0xc38] sm:$0xff] %v2078
    %2495 = vst [vmem:[#allocation5 + $0xc40] sm:$0xff] %v2079
    %2496 = vst [vmem:[#allocation5 + $0xc48] sm:$0xff] %v2080
    %2497 = vst [vmem:[#allocation5 + $0xc50] sm:$0xff] %v2081
    %2498 = vst [vmem:[#allocation5 + $0xc58] sm:$0xff] %v2082
    %2499 = vst [vmem:[#allocation5 + $0xc60] sm:$0xff] %v2083
    %2500 = vst [vmem:[#allocation5 + $0xc68] sm:$0xff] %v2084
    %2501 = vst [vmem:[#allocation5 + $0xc70] sm:$0xff] %v2085
    %2502 = vst [vmem:[#allocation5 + $0xc78] sm:$0xff] %v2086
    %2503 = vst [vmem:[#allocation5 + $0xc80] sm:$0xff] %v2087
    %2504 = vst [vmem:[#allocation5 + $0xc88] sm:$0xff] %v2088
    %2505 = vst [vmem:[#allocation5 + $0xc90] sm:$0xff] %v2089
    %2506 = vst [vmem:[#allocation5 + $0xc98] sm:$0xff] %v2090
    %2507 = vst [vmem:[#allocation5 + $0xca0] sm:$0xff] %v2091
    %2508 = vst [vmem:[#allocation5 + $0xca8] sm:$0xff] %v2092
    %2509 = vst [vmem:[#allocation5 + $0xcb0] sm:$0xff] %v2093
    %2510 = vst [vmem:[#allocation5 + $0xcb8] sm:$0xff] %v2094
    %2511 = vst [vmem:[#allocation5 + $0xcc0] sm:$0xff] %v2095
    %2512 = vst [vmem:[#allocation5 + $0xcc8] sm:$0xff] %v2096
    %2513 = vst [vmem:[#allocation5 + $0xcd0] sm:$0xff] %v2097
    %2514 = vst [vmem:[#allocation5 + $0xcd8] sm:$0xff] %v2098
    %2515 = vst [vmem:[#allocation5 + $0xce0] sm:$0xff] %v2099
    %2516 = vst [vmem:[#allocation5 + $0xce8] sm:$0xff] %v2100
    %2517 = vst [vmem:[#allocation5 + $0xcf0] sm:$0xff] %v2101
    %2518 = vst [vmem:[#allocation5 + $0xcf8] sm:$0xff] %v2102
    // Predicated region
    $region10: #{tpu_custom_call.1} parent=1 // pred_check
      _
    $region11: #{tpu_custom_call.1} parent=1 // pred_check_branch
      %2520 = sbr.rel (0) target = $region13
    $region12: #{tpu_custom_call.1} parent=1 // pred_region
      %s2522 = ssub.s32 53248, 53248
      %2523 = vsyncadd [#allocation4], %s2522
      %s2524 = sshll.u32 [#allocation5], 4
      %s2525 = int_to_ptr.vmem [resolvable:$true] %s2524
      %2530 = dma.vmem_to_hbm [thread:$0]  %s2525, 53248, %s1, [#allocation4], 4096, 4096, 256
    $region13: #{tpu_custom_call.1} parent=1 // pred_fallthru
      _
    // Predicated region
    $region14: #{tpu_custom_call.1} parent=1 // pred_check
      _
    $region15: #{tpu_custom_call.1} parent=1 // pred_check_branch
      %2532 = sbr.rel (0) target = $region17
    $region16: #{tpu_custom_call.1} parent=1 // pred_region
      %2533 = dma.done [#allocation4], 53248
    $region17: #{tpu_custom_call.1} parent=1 // pred_fallthru
      _
    %2534 = vsyncpa [#allocation3], 1
    %2535 = vsyncpa [#allocation4], 1

</llo_original>
